<compile_context>
chip_gen: v7x
topology: tpu7x:2x2x1
jax: 0.10.0
libtpu: 0.0.40
codegen_flags: <defaults>
</compile_context>

<pallas_src>
import math
import functools

import jax
import jax.numpy as jnp
from jax.experimental import pallas as pl
from jax.experimental.pallas import tpu as pltpu

PAD = 0


# ----------------------------- in-kernel helpers -----------------------------

def _layernorm(x, gamma, beta, eps=1e-5):
    # one-pass statistics: var = E[x^2] - mean^2 (halves the XLU reductions)
    mean = jnp.mean(x, axis=-1, keepdims=True)
    mean2 = jnp.mean(x * x, axis=-1, keepdims=True)
    var = mean2 - mean * mean
    return (x - mean) * jax.lax.rsqrt(var + eps) * gamma + beta


# --------------------------- fused encoder layer ------------------------------
# Pre-norm transformer encoder layer (PrePostProcessing 'n' -> sublayer -> 'da'):
#   h   = x + MHA(LN(x))          (self-attention, PAD keys masked)
#   out = h + FFN(LN(h))          (Linear D->inner, ReLU, Linear inner->D)
# If apply_final_ln, also applies the encoder's postprocess LayerNorm.

def encoder_layer_kernel(x_ref, bias_ref,
                         wqkv_ref, bqkv_ref, wo_ref, bo_ref,
                         g1_ref, be1_ref,
                         w1_ref, b1_ref, w2_ref, b2_ref,
                         g2_ref, be2_ref, gf_ref, bef_ref,
                         out_ref, attn_scratch,
                         *, n_heads, apply_final_ln):
    x = x_ref[0]                                   # [T, D] f32
    T, D = x.shape
    hd = D // n_heads
    scale = 1.0 / math.sqrt(hd)

    bias = bias_ref[0]                             # [1, T]; 0.0 valid, -1e9 PAD

    # ---- multi-head self-attention (pre-norm), fused QKV ----
    hn = _layernorm(x, g1_ref[...], be1_ref[...])
    qkv = jnp.dot(hn.astype(jnp.bfloat16), wqkv_ref[...],
                  preferred_element_type=jnp.float32) + bqkv_ref[...]
    q = qkv[:, :D] * scale                         # fold 1/sqrt(hd) into q once
    qb = q.astype(jnp.bfloat16)
    kb = qkv[:, D:2 * D].astype(jnp.bfloat16)
    vb = qkv[:, 2 * D:].astype(jnp.bfloat16)

    for h in range(n_heads):
        sl = slice(h * hd, (h + 1) * hd)
        # scores = q_h @ k_h^T  (bf16 operands, f32 accumulation)
        scores = jax.lax.dot_general(
            qb[:, sl], kb[:, sl], (((1,), (1,)), ((), ())),
            preferred_element_type=jnp.float32) + bias
        scores = scores - jnp.max(scores, axis=-1, keepdims=True)
        p = jnp.exp(scores)
        p = p * pl.reciprocal(jnp.sum(p, axis=-1, keepdims=True), approx=True)
        # write this head's context directly into its [T, hd] scratch slice
        attn_scratch[:, sl] = jnp.dot(p.astype(jnp.bfloat16), vb[:, sl],
                                      preferred_element_type=jnp.float32)

    attn = jnp.dot(attn_scratch[...].astype(jnp.bfloat16), wo_ref[...],
                   preferred_element_type=jnp.float32) + bo_ref[...]
    h1 = x + attn

    # ---- position-wise feed-forward (pre-norm) ----
    hn2 = _layernorm(h1, g2_ref[...], be2_ref[...])
    ff = jnp.dot(hn2.astype(jnp.bfloat16), w1_ref[...],
                 preferred_element_type=jnp.float32) + b1_ref[...]
    ff = jnp.maximum(ff, 0.0)
    ff = jnp.dot(ff.astype(jnp.bfloat16), w2_ref[...],
                 preferred_element_type=jnp.float32) + b2_ref[...]
    out = h1 + ff

    if apply_final_ln:                             # fused postprocess_layer 'n'
        out = _layernorm(out, gf_ref[...], bef_ref[...])
    out_ref[0] = out


def run_encoder_layer(x, attn_bias, lp, ln_g, ln_b, n_heads, apply_final_ln):
    B, T, D = x.shape
    inner = lp["w1"].shape[1]

    def wspec(shape):
        return pl.BlockSpec(shape, lambda b: tuple(0 for _ in shape))

    kernel = functools.partial(encoder_layer_kernel, n_heads=n_heads,
                               apply_final_ln=apply_final_ln)
    return pl.pallas_call(
        kernel,
        out_shape=jax.ShapeDtypeStruct((B, T, D), jnp.float32),
        grid=(B,),
        in_specs=[
            pl.BlockSpec((1, T, D), lambda b: (b, 0, 0)),      # x
            pl.BlockSpec((1, 1, T), lambda b: (b, 0, 0)),      # additive PAD bias
            wspec((D, 3 * D)), wspec((1, 3 * D)),              # Wqkv (bf16), bqkv
            wspec((D, D)), wspec((1, D)),                      # Wo (bf16), bo
            wspec((1, D)), wspec((1, D)),                      # ln1 gamma, beta
            wspec((D, inner)), wspec((1, inner)),              # W1 (bf16), b1
            wspec((inner, D)), wspec((1, D)),                  # W2 (bf16), b2
            wspec((1, D)), wspec((1, D)),                      # ln2 gamma, beta
            wspec((1, D)), wspec((1, D)),                      # final LN gamma, beta
        ],
        out_specs=pl.BlockSpec((1, T, D), lambda b: (b, 0, 0)),
        scratch_shapes=[pltpu.VMEM((T, D), jnp.float32)],      # per-head attn slab
        compiler_params=pltpu.CompilerParams(dimension_semantics=("parallel",)),
    )(x, attn_bias,
      lp["wqkv"], lp["bqkv"], lp["wo"], lp["bo"],
      lp["g1"], lp["be1"],
      lp["w1"], lp["b1"], lp["w2"], lp["b2"],
      lp["g2"], lp["be2"], ln_g, ln_b)


# ------------------------------- glue (JAX) -----------------------------------

def positional_encoding(T, D):
    pos = jnp.arange(T, dtype=jnp.float32)[:, None]
    i = jnp.arange(D // 2, dtype=jnp.float32)[None, :]
    div = jnp.exp(-math.log(10000.0) * (2.0 * i) / D)
    pe = jnp.zeros((T, D), dtype=jnp.float32)
    pe = pe.at[:, 0::2].set(jnp.sin(pos * div))
    pe = pe.at[:, 1::2].set(jnp.cos(pos * div))
    return pe


def fct_encoder_forward(input_ids, params, n_heads):
    """Mirrors FCTransformerEncoder.forward (eval mode, time='positional_encoding')."""
    B, T = input_ids.shape
    D = params["word_lut"].shape[1]

    # embedded_dropout (dropout=0 at eval) -> plain embedding lookup
    emb = jnp.take(params["word_lut"], input_ids, axis=0)       # [B, T, D]
    emb = emb * math.sqrt(D)                                     # scale by sqrt(d_model)
    emb = emb + positional_encoding(T, D)[None]                  # time_transformer
    # preprocess_layer: sequence='d' (dropout) -> identity at eval

    mask_src = (input_ids == PAD)[:, None, :]                    # [B, 1, T] bool
    # additive attention bias: 0.0 for real tokens, -1e9 for PAD keys
    attn_bias = jnp.where(input_ids == PAD, -1e9, 0.0).astype(jnp.float32)[:, None, :]

    n_layers = len(params["layers"])
    context = emb
    bank = []
    # TODO(synk): FCTEncoderLayer internals (dense cross-layer attention over the
    # memory bank) are not given in the reference; each layer here is a standard
    # pre-norm self-attention + FFN block and the memory bank collects the
    # per-layer inputs, matching the (context, memory_bank) interface.
    for li, lp in enumerate(params["layers"]):
        bank.append(context)
        context = run_encoder_layer(context, attn_bias, lp,
                                    params["ln_g"], params["ln_b"],
                                    n_heads, apply_final_ln=(li == n_layers - 1))
    bank.append(context)   # == postprocess LayerNorm(last layer out), fused in-kernel
    memory_bank = jnp.stack(bank, axis=0)                        # single stack, no O(L^2)
    return memory_bank, mask_src


# ---------------------------- deterministic params ----------------------------

def init_params(key, vocab, D, inner, n_layers):
    def nrm(k, shape, s=0.02):
        return jax.random.normal(k, shape, dtype=jnp.float32) * s

    keys = jax.random.split(key, 2 + n_layers)
    word_lut = nrm(keys[0], (vocab, D), 1.0)
    word_lut = word_lut.at[PAD].set(0.0)     # padding_idx=PAD row is zero

    layers = []
    for li in range(n_layers):
        ks = jax.random.split(keys[2 + li], 8)
        wq, wk, wv = nrm(ks[0], (D, D)), nrm(ks[1], (D, D)), nrm(ks[2], (D, D))
        layers.append(dict(
            # fused QKV projection; matmul weights stored in bf16 for the MXU
            wqkv=jnp.concatenate([wq, wk, wv], axis=1).astype(jnp.bfloat16),
            bqkv=jnp.zeros((1, 3 * D), jnp.float32),
            wo=nrm(ks[3], (D, D)).astype(jnp.bfloat16),
            bo=jnp.zeros((1, D), jnp.float32),
            g1=jnp.ones((1, D), jnp.float32), be1=jnp.zeros((1, D), jnp.float32),
            w1=nrm(ks[4], (D, inner)).astype(jnp.bfloat16),
            b1=jnp.zeros((1, inner), jnp.float32),
            w2=nrm(ks[5], (inner, D)).astype(jnp.bfloat16),
            b2=jnp.zeros((1, D), jnp.float32),
            g2=jnp.ones((1, D), jnp.float32), be2=jnp.zeros((1, D), jnp.float32),
        ))

    return dict(word_lut=word_lut, layers=layers,
                ln_g=jnp.ones((1, D), jnp.float32),
                ln_b=jnp.zeros((1, D), jnp.float32))


# ----------------------------------- main --------------------------------------

if __name__ == "__main__":
    B, T = 2, 8
    D, n_heads, inner, n_layers, vocab = 32, 4, 64, 2, 50

    key = jax.random.PRNGKey(0)
    kp, kx = jax.random.split(key)
    params = init_params(kp, vocab, D, inner, n_layers)

    input_ids = jax.random.randint(kx, (B, T), 1, vocab)   # batch_size x len_src
    input_ids = input_ids.at[1, -2:].set(PAD)               # some PAD positions

    memory_bank, mask_src = fct_encoder_forward(input_ids, params, n_heads)
    jax.block_until_ready(memory_bank)
    jax.block_until_ready(mask_src)

    assert memory_bank.shape == (n_layers + 1, B, T, D)
    assert mask_src.shape == (B, 1, T)
    assert bool(jnp.all(jnp.isfinite(memory_bank)))
    print("KERNEL_OK")
</pallas_src>

<mosaic_0001>
module attributes {stable_mosaic.version = 11 : i64} {
  func.func @encoder_layer_kernel(%arg0: i32, %arg1: memref<1x8x32xf32, #tpu.memory_space<vmem>>, %arg2: memref<1x1x8xf32, #tpu.memory_space<vmem>>, %arg3: memref<32x96xbf16, #tpu.memory_space<vmem>>, %arg4: memref<1x96xf32, #tpu.memory_space<vmem>>, %arg5: memref<32x32xbf16, #tpu.memory_space<vmem>>, %arg6: memref<1x32xf32, #tpu.memory_space<vmem>>, %arg7: memref<1x32xf32, #tpu.memory_space<vmem>>, %arg8: memref<1x32xf32, #tpu.memory_space<vmem>>, %arg9: memref<32x64xbf16, #tpu.memory_space<vmem>>, %arg10: memref<1x64xf32, #tpu.memory_space<vmem>>, %arg11: memref<64x32xbf16, #tpu.memory_space<vmem>>, %arg12: memref<1x32xf32, #tpu.memory_space<vmem>>, %arg13: memref<1x32xf32, #tpu.memory_space<vmem>>, %arg14: memref<1x32xf32, #tpu.memory_space<vmem>>, %arg15: memref<1x32xf32, #tpu.memory_space<vmem>>, %arg16: memref<1x32xf32, #tpu.memory_space<vmem>>, %arg17: memref<1x8x32xf32, #tpu.memory_space<vmem>>, %arg18: memref<8x32xf32, #tpu.memory_space<vmem>>) attributes {dimension_semantics = [#tpu.dimension_semantics<parallel>], iteration_bounds = array<i64: 2>, scalar_prefetch = 0 : i64, scratch_operands = 1 : i64, tpu.core_type = #tpu.core_type<tc>, window_params = [{transform_indices = @transform_0, window_bounds = array<i64: 1, 8, 32>}, {transform_indices = @transform_1, window_bounds = array<i64: 1, 1, 8>}, {pipeline_mode = #tpu.pipeline_mode<synchronous>, transform_indices = @transform_2, window_bounds = array<i64: 32, 96>}, {pipeline_mode = #tpu.pipeline_mode<synchronous>, transform_indices = @transform_3, window_bounds = array<i64: 1, 96>}, {pipeline_mode = #tpu.pipeline_mode<synchronous>, transform_indices = @transform_4, window_bounds = array<i64: 32, 32>}, {pipeline_mode = #tpu.pipeline_mode<synchronous>, transform_indices = @transform_5, window_bounds = array<i64: 1, 32>}, {pipeline_mode = #tpu.pipeline_mode<synchronous>, transform_indices = @transform_6, window_bounds = array<i64: 1, 32>}, {pipeline_mode = #tpu.pipeline_mode<synchronous>, transform_indices = @transform_7, window_bounds = array<i64: 1, 32>}, {pipeline_mode = #tpu.pipeline_mode<synchronous>, transform_indices = @transform_8, window_bounds = array<i64: 32, 64>}, {pipeline_mode = #tpu.pipeline_mode<synchronous>, transform_indices = @transform_9, window_bounds = array<i64: 1, 64>}, {pipeline_mode = #tpu.pipeline_mode<synchronous>, transform_indices = @transform_10, window_bounds = array<i64: 64, 32>}, {pipeline_mode = #tpu.pipeline_mode<synchronous>, transform_indices = @transform_11, window_bounds = array<i64: 1, 32>}, {pipeline_mode = #tpu.pipeline_mode<synchronous>, transform_indices = @transform_12, window_bounds = array<i64: 1, 32>}, {pipeline_mode = #tpu.pipeline_mode<synchronous>, transform_indices = @transform_13, window_bounds = array<i64: 1, 32>}, {pipeline_mode = #tpu.pipeline_mode<synchronous>, transform_indices = @transform_14, window_bounds = array<i64: 1, 32>}, {pipeline_mode = #tpu.pipeline_mode<synchronous>, transform_indices = @transform_15, window_bounds = array<i64: 1, 32>}, {transform_indices = @transform_16, window_bounds = array<i64: 1, 8, 32>}]} {
    %c0 = arith.constant 0 : index
    %c0_0 = arith.constant 0 : index
    %c0_1 = arith.constant 0 : index
    %0 = vector.load %arg1[%c0, %c0_0, %c0_1] : memref<1x8x32xf32, #tpu.memory_space<vmem>>, vector<1x8x32xf32>
    %1 = vector.shape_cast %0 : vector<1x8x32xf32> to vector<8x32xf32>
    %c0_2 = arith.constant 0 : index
    %c0_3 = arith.constant 0 : index
    %c0_4 = arith.constant 0 : index
    %2 = vector.load %arg2[%c0_2, %c0_3, %c0_4] : memref<1x1x8xf32, #tpu.memory_space<vmem>>, vector<1x1x8xf32>
    %3 = vector.shape_cast %2 : vector<1x1x8xf32> to vector<1x8xf32>
    %c0_5 = arith.constant 0 : index
    %c0_6 = arith.constant 0 : index
    %4 = vector.load %arg7[%c0_5, %c0_6] : memref<1x32xf32, #tpu.memory_space<vmem>>, vector<1x32xf32>
    %c0_7 = arith.constant 0 : index
    %c0_8 = arith.constant 0 : index
    %5 = vector.load %arg8[%c0_7, %c0_8] : memref<1x32xf32, #tpu.memory_space<vmem>>, vector<1x32xf32>
    %cst = arith.constant dense<0.000000e+00> : vector<8xf32>
    %6 = vector.multi_reduction <add>, %1, %cst [1] : vector<8x32xf32> to vector<8xf32>
    %7 = vector.shape_cast %6 : vector<8xf32> to vector<8x1xf32>
    %cst_9 = arith.constant 3.200000e+01 : f32
    %8 = vector.broadcast %cst_9 : f32 to vector<8x1xf32>
    %9 = arith.divf %7, %8 : vector<8x1xf32>
    %10 = arith.mulf %1, %1 : vector<8x32xf32>
    %cst_10 = arith.constant dense<0.000000e+00> : vector<8xf32>
    %11 = vector.multi_reduction <add>, %10, %cst_10 [1] : vector<8x32xf32> to vector<8xf32>
    %12 = vector.shape_cast %11 : vector<8xf32> to vector<8x1xf32>
    %cst_11 = arith.constant 3.200000e+01 : f32
    %13 = vector.broadcast %cst_11 : f32 to vector<8x1xf32>
    %14 = arith.divf %12, %13 : vector<8x1xf32>
    %15 = arith.mulf %9, %9 : vector<8x1xf32>
    %16 = arith.subf %14, %15 : vector<8x1xf32>
    %17 = vector.broadcast %9 : vector<8x1xf32> to vector<8x32xf32>
    %18 = arith.subf %1, %17 : vector<8x32xf32>
    %cst_12 = arith.constant 9.99999974E-6 : f32
    %19 = vector.broadcast %cst_12 : f32 to vector<8x1xf32>
    %20 = arith.addf %16, %19 : vector<8x1xf32>
    %21 = math.rsqrt %20 : vector<8x1xf32>
    %22 = vector.broadcast %21 : vector<8x1xf32> to vector<8x32xf32>
    %23 = arith.mulf %18, %22 : vector<8x32xf32>
    %24 = vector.broadcast %4 : vector<1x32xf32> to vector<8x32xf32>
    %25 = arith.mulf %23, %24 : vector<8x32xf32>
    %26 = vector.broadcast %5 : vector<1x32xf32> to vector<8x32xf32>
    %27 = arith.addf %25, %26 : vector<8x32xf32>
    %28 = arith.truncf %27 : vector<8x32xf32> to vector<8x32xbf16>
    %c0_13 = arith.constant 0 : index
    %c0_14 = arith.constant 0 : index
    %29 = vector.load %arg3[%c0_13, %c0_14] : memref<32x96xbf16, #tpu.memory_space<vmem>>, vector<32x96xbf16>
    %cst_15 = arith.constant dense<0.000000e+00> : vector<8x96xf32>
    %30 = tpu.matmul %28, %29, %cst_15 {dimension_numbers = #tpu.dot_dimension_numbers<[1], [0], [0], [1], [0, 0, 1, 1], [], []>} : vector<8x32xbf16>, vector<32x96xbf16>, vector<8x96xf32> -> vector<8x96xf32>
    %c0_16 = arith.constant 0 : index
    %c0_17 = arith.constant 0 : index
    %31 = vector.load %arg4[%c0_16, %c0_17] : memref<1x96xf32, #tpu.memory_space<vmem>>, vector<1x96xf32>
    %32 = vector.broadcast %31 : vector<1x96xf32> to vector<8x96xf32>
    %33 = arith.addf %30, %32 : vector<8x96xf32>
    %34 = vector.extract_strided_slice %33 {offsets = [0, 0], sizes = [8, 32], strides = [1, 1]} : vector<8x96xf32> to vector<8x32xf32>
    %cst_18 = arith.constant 0.353553385 : f32
    %35 = vector.broadcast %cst_18 : f32 to vector<8x32xf32>
    %36 = arith.mulf %34, %35 : vector<8x32xf32>
    %37 = arith.truncf %36 : vector<8x32xf32> to vector<8x32xbf16>
    %38 = vector.extract_strided_slice %33 {offsets = [0, 32], sizes = [8, 32], strides = [1, 1]} : vector<8x96xf32> to vector<8x32xf32>
    %39 = arith.truncf %38 : vector<8x32xf32> to vector<8x32xbf16>
    %40 = vector.extract_strided_slice %33 {offsets = [0, 64], sizes = [8, 32], strides = [1, 1]} : vector<8x96xf32> to vector<8x32xf32>
    %41 = arith.truncf %40 : vector<8x32xf32> to vector<8x32xbf16>
    %42 = vector.extract_strided_slice %37 {offsets = [0, 0], sizes = [8, 8], strides = [1, 1]} : vector<8x32xbf16> to vector<8x8xbf16>
    %43 = vector.extract_strided_slice %39 {offsets = [0, 0], sizes = [8, 8], strides = [1, 1]} : vector<8x32xbf16> to vector<8x8xbf16>
    %cst_19 = arith.constant dense<0.000000e+00> : vector<8x8xf32>
    %44 = tpu.matmul %42, %43, %cst_19 {dimension_numbers = #tpu.dot_dimension_numbers<[1], [1], [0], [0], [0, 0, 1, 0], [], []>} : vector<8x8xbf16>, vector<8x8xbf16>, vector<8x8xf32> -> vector<8x8xf32>
    %45 = vector.broadcast %3 : vector<1x8xf32> to vector<8x8xf32>
    %46 = arith.addf %44, %45 : vector<8x8xf32>
    %cst_20 = arith.constant dense<0xFF800000> : vector<8xf32>
    %47 = vector.multi_reduction <maximumf>, %46, %cst_20 [1] : vector<8x8xf32> to vector<8xf32>
    %48 = vector.shape_cast %47 : vector<8xf32> to vector<8x1xf32>
    %49 = vector.broadcast %48 : vector<8x1xf32> to vector<8x8xf32>
    %50 = arith.subf %46, %49 : vector<8x8xf32>
    %51 = math.exp %50 : vector<8x8xf32>
    %cst_21 = arith.constant dense<0.000000e+00> : vector<8xf32>
    %52 = vector.multi_reduction <add>, %51, %cst_21 [1] : vector<8x8xf32> to vector<8xf32>
    %53 = vector.shape_cast %52 : vector<8xf32> to vector<8x1xf32>
    %54 = tpu.reciprocal %53 {approx = true} : vector<8x1xf32> -> vector<8x1xf32>
    %55 = vector.broadcast %54 : vector<8x1xf32> to vector<8x8xf32>
    %56 = arith.mulf %51, %55 : vector<8x8xf32>
    %57 = arith.truncf %56 : vector<8x8xf32> to vector<8x8xbf16>
    %58 = vector.extract_strided_slice %41 {offsets = [0, 0], sizes = [8, 8], strides = [1, 1]} : vector<8x32xbf16> to vector<8x8xbf16>
    %cst_22 = arith.constant dense<0.000000e+00> : vector<8x8xf32>
    %59 = tpu.matmul %57, %58, %cst_22 {dimension_numbers = #tpu.dot_dimension_numbers<[1], [0], [0], [1], [0, 0, 1, 1], [], []>} : vector<8x8xbf16>, vector<8x8xbf16>, vector<8x8xf32> -> vector<8x8xf32>
    %c0_23 = arith.constant 0 : index
    %c0_24 = arith.constant 0 : index
    %60 = vector.load %arg18[%c0_23, %c0_24] : memref<8x32xf32, #tpu.memory_space<vmem>>, vector<8x8xf32>
    tpu.vector_store %arg18[%c0_23, %c0_24], %59 {strides = array<i32>} : memref<8x32xf32, #tpu.memory_space<vmem>>, vector<8x8xf32>,
    %61 = vector.extract_strided_slice %37 {offsets = [0, 8], sizes = [8, 8], strides = [1, 1]} : vector<8x32xbf16> to vector<8x8xbf16>
    %62 = vector.extract_strided_slice %39 {offsets = [0, 8], sizes = [8, 8], strides = [1, 1]} : vector<8x32xbf16> to vector<8x8xbf16>
    %cst_25 = arith.constant dense<0.000000e+00> : vector<8x8xf32>
    %63 = tpu.matmul %61, %62, %cst_25 {dimension_numbers = #tpu.dot_dimension_numbers<[1], [1], [0], [0], [0, 0, 1, 0], [], []>} : vector<8x8xbf16>, vector<8x8xbf16>, vector<8x8xf32> -> vector<8x8xf32>
    %64 = vector.broadcast %3 : vector<1x8xf32> to vector<8x8xf32>
    %65 = arith.addf %63, %64 : vector<8x8xf32>
    %cst_26 = arith.constant dense<0xFF800000> : vector<8xf32>
    %66 = vector.multi_reduction <maximumf>, %65, %cst_26 [1] : vector<8x8xf32> to vector<8xf32>
    %67 = vector.shape_cast %66 : vector<8xf32> to vector<8x1xf32>
    %68 = vector.broadcast %67 : vector<8x1xf32> to vector<8x8xf32>
    %69 = arith.subf %65, %68 : vector<8x8xf32>
    %70 = math.exp %69 : vector<8x8xf32>
    %cst_27 = arith.constant dense<0.000000e+00> : vector<8xf32>
    %71 = vector.multi_reduction <add>, %70, %cst_27 [1] : vector<8x8xf32> to vector<8xf32>
    %72 = vector.shape_cast %71 : vector<8xf32> to vector<8x1xf32>
    %73 = tpu.reciprocal %72 {approx = true} : vector<8x1xf32> -> vector<8x1xf32>
    %74 = vector.broadcast %73 : vector<8x1xf32> to vector<8x8xf32>
    %75 = arith.mulf %70, %74 : vector<8x8xf32>
    %76 = arith.truncf %75 : vector<8x8xf32> to vector<8x8xbf16>
    %77 = vector.extract_strided_slice %41 {offsets = [0, 8], sizes = [8, 8], strides = [1, 1]} : vector<8x32xbf16> to vector<8x8xbf16>
    %cst_28 = arith.constant dense<0.000000e+00> : vector<8x8xf32>
    %78 = tpu.matmul %76, %77, %cst_28 {dimension_numbers = #tpu.dot_dimension_numbers<[1], [0], [0], [1], [0, 0, 1, 1], [], []>} : vector<8x8xbf16>, vector<8x8xbf16>, vector<8x8xf32> -> vector<8x8xf32>
    %c0_29 = arith.constant 0 : index
    %c8 = arith.constant 8 : index
    %79 = vector.load %arg18[%c0_29, %c8] : memref<8x32xf32, #tpu.memory_space<vmem>>, vector<8x8xf32>
    tpu.vector_store %arg18[%c0_29, %c8], %78 {strides = array<i32>} : memref<8x32xf32, #tpu.memory_space<vmem>>, vector<8x8xf32>,
    %80 = vector.extract_strided_slice %37 {offsets = [0, 16], sizes = [8, 8], strides = [1, 1]} : vector<8x32xbf16> to vector<8x8xbf16>
    %81 = vector.extract_strided_slice %39 {offsets = [0, 16], sizes = [8, 8], strides = [1, 1]} : vector<8x32xbf16> to vector<8x8xbf16>
    %cst_30 = arith.constant dense<0.000000e+00> : vector<8x8xf32>
    %82 = tpu.matmul %80, %81, %cst_30 {dimension_numbers = #tpu.dot_dimension_numbers<[1], [1], [0], [0], [0, 0, 1, 0], [], []>} : vector<8x8xbf16>, vector<8x8xbf16>, vector<8x8xf32> -> vector<8x8xf32>
    %83 = vector.broadcast %3 : vector<1x8xf32> to vector<8x8xf32>
    %84 = arith.addf %82, %83 : vector<8x8xf32>
    %cst_31 = arith.constant dense<0xFF800000> : vector<8xf32>
    %85 = vector.multi_reduction <maximumf>, %84, %cst_31 [1] : vector<8x8xf32> to vector<8xf32>
    %86 = vector.shape_cast %85 : vector<8xf32> to vector<8x1xf32>
    %87 = vector.broadcast %86 : vector<8x1xf32> to vector<8x8xf32>
    %88 = arith.subf %84, %87 : vector<8x8xf32>
    %89 = math.exp %88 : vector<8x8xf32>
    %cst_32 = arith.constant dense<0.000000e+00> : vector<8xf32>
    %90 = vector.multi_reduction <add>, %89, %cst_32 [1] : vector<8x8xf32> to vector<8xf32>
    %91 = vector.shape_cast %90 : vector<8xf32> to vector<8x1xf32>
    %92 = tpu.reciprocal %91 {approx = true} : vector<8x1xf32> -> vector<8x1xf32>
    %93 = vector.broadcast %92 : vector<8x1xf32> to vector<8x8xf32>
    %94 = arith.mulf %89, %93 : vector<8x8xf32>
    %95 = arith.truncf %94 : vector<8x8xf32> to vector<8x8xbf16>
    %96 = vector.extract_strided_slice %41 {offsets = [0, 16], sizes = [8, 8], strides = [1, 1]} : vector<8x32xbf16> to vector<8x8xbf16>
    %cst_33 = arith.constant dense<0.000000e+00> : vector<8x8xf32>
    %97 = tpu.matmul %95, %96, %cst_33 {dimension_numbers = #tpu.dot_dimension_numbers<[1], [0], [0], [1], [0, 0, 1, 1], [], []>} : vector<8x8xbf16>, vector<8x8xbf16>, vector<8x8xf32> -> vector<8x8xf32>
    %c0_34 = arith.constant 0 : index
    %c16 = arith.constant 16 : index
    %98 = vector.load %arg18[%c0_34, %c16] : memref<8x32xf32, #tpu.memory_space<vmem>>, vector<8x8xf32>
    tpu.vector_store %arg18[%c0_34, %c16], %97 {strides = array<i32>} : memref<8x32xf32, #tpu.memory_space<vmem>>, vector<8x8xf32>,
    %99 = vector.extract_strided_slice %37 {offsets = [0, 24], sizes = [8, 8], strides = [1, 1]} : vector<8x32xbf16> to vector<8x8xbf16>
    %100 = vector.extract_strided_slice %39 {offsets = [0, 24], sizes = [8, 8], strides = [1, 1]} : vector<8x32xbf16> to vector<8x8xbf16>
    %cst_35 = arith.constant dense<0.000000e+00> : vector<8x8xf32>
    %101 = tpu.matmul %99, %100, %cst_35 {dimension_numbers = #tpu.dot_dimension_numbers<[1], [1], [0], [0], [0, 0, 1, 0], [], []>} : vector<8x8xbf16>, vector<8x8xbf16>, vector<8x8xf32> -> vector<8x8xf32>
    %102 = vector.broadcast %3 : vector<1x8xf32> to vector<8x8xf32>
    %103 = arith.addf %101, %102 : vector<8x8xf32>
    %cst_36 = arith.constant dense<0xFF800000> : vector<8xf32>
    %104 = vector.multi_reduction <maximumf>, %103, %cst_36 [1] : vector<8x8xf32> to vector<8xf32>
    %105 = vector.shape_cast %104 : vector<8xf32> to vector<8x1xf32>
    %106 = vector.broadcast %105 : vector<8x1xf32> to vector<8x8xf32>
    %107 = arith.subf %103, %106 : vector<8x8xf32>
    %108 = math.exp %107 : vector<8x8xf32>
    %cst_37 = arith.constant dense<0.000000e+00> : vector<8xf32>
    %109 = vector.multi_reduction <add>, %108, %cst_37 [1] : vector<8x8xf32> to vector<8xf32>
    %110 = vector.shape_cast %109 : vector<8xf32> to vector<8x1xf32>
    %111 = tpu.reciprocal %110 {approx = true} : vector<8x1xf32> -> vector<8x1xf32>
    %112 = vector.broadcast %111 : vector<8x1xf32> to vector<8x8xf32>
    %113 = arith.mulf %108, %112 : vector<8x8xf32>
    %114 = arith.truncf %113 : vector<8x8xf32> to vector<8x8xbf16>
    %115 = vector.extract_strided_slice %41 {offsets = [0, 24], sizes = [8, 8], strides = [1, 1]} : vector<8x32xbf16> to vector<8x8xbf16>
    %cst_38 = arith.constant dense<0.000000e+00> : vector<8x8xf32>
    %116 = tpu.matmul %114, %115, %cst_38 {dimension_numbers = #tpu.dot_dimension_numbers<[1], [0], [0], [1], [0, 0, 1, 1], [], []>} : vector<8x8xbf16>, vector<8x8xbf16>, vector<8x8xf32> -> vector<8x8xf32>
    %c0_39 = arith.constant 0 : index
    %c24 = arith.constant 24 : index
    %117 = vector.load %arg18[%c0_39, %c24] : memref<8x32xf32, #tpu.memory_space<vmem>>, vector<8x8xf32>
    tpu.vector_store %arg18[%c0_39, %c24], %116 {strides = array<i32>} : memref<8x32xf32, #tpu.memory_space<vmem>>, vector<8x8xf32>,
    %c0_40 = arith.constant 0 : index
    %c0_41 = arith.constant 0 : index
    %118 = vector.load %arg18[%c0_40, %c0_41] : memref<8x32xf32, #tpu.memory_space<vmem>>, vector<8x32xf32>
    %119 = arith.truncf %118 : vector<8x32xf32> to vector<8x32xbf16>
    %c0_42 = arith.constant 0 : index
    %c0_43 = arith.constant 0 : index
    %120 = vector.load %arg5[%c0_42, %c0_43] : memref<32x32xbf16, #tpu.memory_space<vmem>>, vector<32x32xbf16>
    %cst_44 = arith.constant dense<0.000000e+00> : vector<8x32xf32>
    %121 = tpu.matmul %119, %120, %cst_44 {dimension_numbers = #tpu.dot_dimension_numbers<[1], [0], [0], [1], [0, 0, 1, 1], [], []>} : vector<8x32xbf16>, vector<32x32xbf16>, vector<8x32xf32> -> vector<8x32xf32>
    %c0_45 = arith.constant 0 : index
    %c0_46 = arith.constant 0 : index
    %122 = vector.load %arg6[%c0_45, %c0_46] : memref<1x32xf32, #tpu.memory_space<vmem>>, vector<1x32xf32>
    %123 = vector.broadcast %122 : vector<1x32xf32> to vector<8x32xf32>
    %124 = arith.addf %121, %123 : vector<8x32xf32>
    %125 = arith.addf %1, %124 : vector<8x32xf32>
    %c0_47 = arith.constant 0 : index
    %c0_48 = arith.constant 0 : index
    %126 = vector.load %arg13[%c0_47, %c0_48] : memref<1x32xf32, #tpu.memory_space<vmem>>, vector<1x32xf32>
    %c0_49 = arith.constant 0 : index
    %c0_50 = arith.constant 0 : index
    %127 = vector.load %arg14[%c0_49, %c0_50] : memref<1x32xf32, #tpu.memory_space<vmem>>, vector<1x32xf32>
    %cst_51 = arith.constant dense<0.000000e+00> : vector<8xf32>
    %128 = vector.multi_reduction <add>, %125, %cst_51 [1] : vector<8x32xf32> to vector<8xf32>
    %129 = vector.shape_cast %128 : vector<8xf32> to vector<8x1xf32>
    %cst_52 = arith.constant 3.200000e+01 : f32
    %130 = vector.broadcast %cst_52 : f32 to vector<8x1xf32>
    %131 = arith.divf %129, %130 : vector<8x1xf32>
    %132 = arith.mulf %125, %125 : vector<8x32xf32>
    %cst_53 = arith.constant dense<0.000000e+00> : vector<8xf32>
    %133 = vector.multi_reduction <add>, %132, %cst_53 [1] : vector<8x32xf32> to vector<8xf32>
    %134 = vector.shape_cast %133 : vector<8xf32> to vector<8x1xf32>
    %cst_54 = arith.constant 3.200000e+01 : f32
    %135 = vector.broadcast %cst_54 : f32 to vector<8x1xf32>
    %136 = arith.divf %134, %135 : vector<8x1xf32>
    %137 = arith.mulf %131, %131 : vector<8x1xf32>
    %138 = arith.subf %136, %137 : vector<8x1xf32>
    %139 = vector.broadcast %131 : vector<8x1xf32> to vector<8x32xf32>
    %140 = arith.subf %125, %139 : vector<8x32xf32>
    %cst_55 = arith.constant 9.99999974E-6 : f32
    %141 = vector.broadcast %cst_55 : f32 to vector<8x1xf32>
    %142 = arith.addf %138, %141 : vector<8x1xf32>
    %143 = math.rsqrt %142 : vector<8x1xf32>
    %144 = vector.broadcast %143 : vector<8x1xf32> to vector<8x32xf32>
    %145 = arith.mulf %140, %144 : vector<8x32xf32>
    %146 = vector.broadcast %126 : vector<1x32xf32> to vector<8x32xf32>
    %147 = arith.mulf %145, %146 : vector<8x32xf32>
    %148 = vector.broadcast %127 : vector<1x32xf32> to vector<8x32xf32>
    %149 = arith.addf %147, %148 : vector<8x32xf32>
    %150 = arith.truncf %149 : vector<8x32xf32> to vector<8x32xbf16>
    %c0_56 = arith.constant 0 : index
    %c0_57 = arith.constant 0 : index
    %151 = vector.load %arg9[%c0_56, %c0_57] : memref<32x64xbf16, #tpu.memory_space<vmem>>, vector<32x64xbf16>
    %cst_58 = arith.constant dense<0.000000e+00> : vector<8x64xf32>
    %152 = tpu.matmul %150, %151, %cst_58 {dimension_numbers = #tpu.dot_dimension_numbers<[1], [0], [0], [1], [0, 0, 1, 1], [], []>} : vector<8x32xbf16>, vector<32x64xbf16>, vector<8x64xf32> -> vector<8x64xf32>
    %c0_59 = arith.constant 0 : index
    %c0_60 = arith.constant 0 : index
    %153 = vector.load %arg10[%c0_59, %c0_60] : memref<1x64xf32, #tpu.memory_space<vmem>>, vector<1x64xf32>
    %154 = vector.broadcast %153 : vector<1x64xf32> to vector<8x64xf32>
    %155 = arith.addf %152, %154 : vector<8x64xf32>
    %cst_61 = arith.constant 0.000000e+00 : f32
    %156 = vector.broadcast %cst_61 : f32 to vector<8x64xf32>
    %157 = arith.maximumf %155, %156 : vector<8x64xf32>
    %158 = arith.truncf %157 : vector<8x64xf32> to vector<8x64xbf16>
    %c0_62 = arith.constant 0 : index
    %c0_63 = arith.constant 0 : index
    %159 = vector.load %arg11[%c0_62, %c0_63] : memref<64x32xbf16, #tpu.memory_space<vmem>>, vector<64x32xbf16>
    %cst_64 = arith.constant dense<0.000000e+00> : vector<8x32xf32>
    %160 = tpu.matmul %158, %159, %cst_64 {dimension_numbers = #tpu.dot_dimension_numbers<[1], [0], [0], [1], [0, 0, 1, 1], [], []>} : vector<8x64xbf16>, vector<64x32xbf16>, vector<8x32xf32> -> vector<8x32xf32>
    %c0_65 = arith.constant 0 : index
    %c0_66 = arith.constant 0 : index
    %161 = vector.load %arg12[%c0_65, %c0_66] : memref<1x32xf32, #tpu.memory_space<vmem>>, vector<1x32xf32>
    %162 = vector.broadcast %161 : vector<1x32xf32> to vector<8x32xf32>
    %163 = arith.addf %160, %162 : vector<8x32xf32>
    %164 = arith.addf %125, %163 : vector<8x32xf32>
    %c0_67 = arith.constant 0 : index
    %c0_68 = arith.constant 0 : index
    %c0_69 = arith.constant 0 : index
    %165 = vector.load %arg17[%c0_67, %c0_68, %c0_69] : memref<1x8x32xf32, #tpu.memory_space<vmem>>, vector<1x8x32xf32>
    %166 = vector.shape_cast %165 : vector<1x8x32xf32> to vector<8x32xf32>
    %167 = vector.shape_cast %164 : vector<8x32xf32> to vector<1x8x32xf32>
    tpu.vector_store %arg17[%c0_67, %c0_68, %c0_69], %167 {strides = array<i32>} : memref<1x8x32xf32, #tpu.memory_space<vmem>>, vector<1x8x32xf32>,
    return
  }
  func.func @transform_0(%arg0: i32) -> (i32, i32, i32) {
    %c0_i32 = arith.constant 0 : i32
    %c0_i32_0 = arith.constant 0 : i32
    %c0_i32_1 = arith.constant 0 : i32
    return %arg0, %c0_i32, %c0_i32_0 : i32, i32, i32
  }
  func.func @transform_1(%arg0: i32) -> (i32, i32, i32) {
    %c0_i32 = arith.constant 0 : i32
    %c0_i32_0 = arith.constant 0 : i32
    %c0_i32_1 = arith.constant 0 : i32
    return %arg0, %c0_i32, %c0_i32_0 : i32, i32, i32
  }
  func.func @transform_2(%arg0: i32) -> (i32, i32) {
    %c0_i32 = arith.constant 0 : i32
    %c0_i32_0 = arith.constant 0 : i32
    %c0_i32_1 = arith.constant 0 : i32
    return %c0_i32, %c0_i32_0 : i32, i32
  }
  func.func @transform_3(%arg0: i32) -> (i32, i32) {
    %c0_i32 = arith.constant 0 : i32
    %c0_i32_0 = arith.constant 0 : i32
    %c0_i32_1 = arith.constant 0 : i32
    return %c0_i32, %c0_i32_0 : i32, i32
  }
  func.func @transform_4(%arg0: i32) -> (i32, i32) {
    %c0_i32 = arith.constant 0 : i32
    %c0_i32_0 = arith.constant 0 : i32
    %c0_i32_1 = arith.constant 0 : i32
    return %c0_i32, %c0_i32_0 : i32, i32
  }
  func.func @transform_5(%arg0: i32) -> (i32, i32) {
    %c0_i32 = arith.constant 0 : i32
    %c0_i32_0 = arith.constant 0 : i32
    %c0_i32_1 = arith.constant 0 : i32
    return %c0_i32, %c0_i32_0 : i32, i32
  }
  func.func @transform_6(%arg0: i32) -> (i32, i32) {
    %c0_i32 = arith.constant 0 : i32
    %c0_i32_0 = arith.constant 0 : i32
    %c0_i32_1 = arith.constant 0 : i32
    return %c0_i32, %c0_i32_0 : i32, i32
  }
  func.func @transform_7(%arg0: i32) -> (i32, i32) {
    %c0_i32 = arith.constant 0 : i32
    %c0_i32_0 = arith.constant 0 : i32
    %c0_i32_1 = arith.constant 0 : i32
    return %c0_i32, %c0_i32_0 : i32, i32
  }
  func.func @transform_8(%arg0: i32) -> (i32, i32) {
    %c0_i32 = arith.constant 0 : i32
    %c0_i32_0 = arith.constant 0 : i32
    %c0_i32_1 = arith.constant 0 : i32
    return %c0_i32, %c0_i32_0 : i32, i32
  }
  func.func @transform_9(%arg0: i32) -> (i32, i32) {
    %c0_i32 = arith.constant 0 : i32
    %c0_i32_0 = arith.constant 0 : i32
    %c0_i32_1 = arith.constant 0 : i32
    return %c0_i32, %c0_i32_0 : i32, i32
  }
  func.func @transform_10(%arg0: i32) -> (i32, i32) {
    %c0_i32 = arith.constant 0 : i32
    %c0_i32_0 = arith.constant 0 : i32
    %c0_i32_1 = arith.constant 0 : i32
    return %c0_i32, %c0_i32_0 : i32, i32
  }
  func.func @transform_11(%arg0: i32) -> (i32, i32) {
    %c0_i32 = arith.constant 0 : i32
    %c0_i32_0 = arith.constant 0 : i32
    %c0_i32_1 = arith.constant 0 : i32
    return %c0_i32, %c0_i32_0 : i32, i32
  }
  func.func @transform_12(%arg0: i32) -> (i32, i32) {
    %c0_i32 = arith.constant 0 : i32
    %c0_i32_0 = arith.constant 0 : i32
    %c0_i32_1 = arith.constant 0 : i32
    return %c0_i32, %c0_i32_0 : i32, i32
  }
  func.func @transform_13(%arg0: i32) -> (i32, i32) {
    %c0_i32 = arith.constant 0 : i32
    %c0_i32_0 = arith.constant 0 : i32
    %c0_i32_1 = arith.constant 0 : i32
    return %c0_i32, %c0_i32_0 : i32, i32
  }
  func.func @transform_14(%arg0: i32) -> (i32, i32) {
    %c0_i32 = arith.constant 0 : i32
    %c0_i32_0 = arith.constant 0 : i32
    %c0_i32_1 = arith.constant 0 : i32
    return %c0_i32, %c0_i32_0 : i32, i32
  }
  func.func @transform_15(%arg0: i32) -> (i32, i32) {
    %c0_i32 = arith.constant 0 : i32
    %c0_i32_0 = arith.constant 0 : i32
    %c0_i32_1 = arith.constant 0 : i32
    return %c0_i32, %c0_i32_0 : i32, i32
  }
  func.func @transform_16(%arg0: i32) -> (i32, i32, i32) {
    %c0_i32 = arith.constant 0 : i32
    %c0_i32_0 = arith.constant 0 : i32
    %c0_i32_1 = arith.constant 0 : i32
    return %arg0, %c0_i32, %c0_i32_0 : i32, i32, i32
  }
}

</mosaic_0001>

<llo_original>
// kernel: tpu_custom_call.1
$region0: #{tpu_custom_call.1}
  #allocation0 [shape = 'u32[]', space=smem, size = 0x4, offset = 0x4, fixed_abs, tag = 'smem constant byte address 0x4 - core index']
  #allocation1 [shape = 'u32[144,128]{1,0:T(1,128)}', space=vmem, size = 0x12000, scoped, tag = 'internal scratch']
  #allocation2 [shape = 'f32[8,32]{1,0:T(8,128)}', space=vmem, size = 0x1000, scoped, tag = 'scratch operand']
  %s0 = inlined_call_operand.vmem [shape: f32[2,8,32], index: 0, kind: input, shape index: {}]
  %s1 = inlined_call_operand.vmem [shape: f32[2,1,8], index: 1, kind: input, shape index: {}]
  %s2 = inlined_call_operand.vmem [shape: bf16[32,96], index: 2, kind: input, shape index: {}]
  %s3 = inlined_call_operand.vmem [shape: f32[1,96], index: 3, kind: input, shape index: {}]
  %s4 = inlined_call_operand.vmem [shape: bf16[32,32], index: 4, kind: input, shape index: {}]
  %s5 = inlined_call_operand.vmem [shape: f32[1,32], index: 5, kind: input, shape index: {}]
  %s6 = inlined_call_operand.vmem [shape: f32[1,32], index: 6, kind: input, shape index: {}]
  %s7 = inlined_call_operand.vmem [shape: f32[1,32], index: 7, kind: input, shape index: {}]
  %s8 = inlined_call_operand.hbm [shape: bf16[32,64], index: 8, kind: input, shape index: {}]
  %s9 = inlined_call_operand.vmem [shape: f32[1,64], index: 9, kind: input, shape index: {}]
  %s10 = inlined_call_operand.vmem [shape: bf16[64,32], index: 10, kind: input, shape index: {}]
  %s11 = inlined_call_operand.vmem [shape: f32[1,32], index: 11, kind: input, shape index: {}]
  %s12 = inlined_call_operand.vmem [shape: f32[1,32], index: 12, kind: input, shape index: {}]
  %s13 = inlined_call_operand.vmem [shape: f32[1,32], index: 13, kind: input, shape index: {}]
  %s14 = inlined_call_operand.vmem [shape: f32[1,32], index: 14, kind: input, shape index: {}]
  %s15 = inlined_call_operand.vmem [shape: f32[1,32], index: 15, kind: input, shape index: {}]
  %s16 = inlined_call_operand.hbm [shape: f32[2,8,32], index: 16, kind: output, shape index: {}]
  %s17 = sld [smem:[#allocation0]]
  $region101: #{tpu_custom_call.1} parent=0
    _
  %s19 = ssub.s32 1, %s17
  %s20 = scalar_select 0, %s19, %s17
  $region1: #{tpu_custom_call.1} parent=0
    #allocation3 [shape = 'u8[8192]{0}', space=vmem, size = 0x2000, scoped, tag = 'input window, operand 8, single buffered']
    #allocation4 [shape = 's32[2]{0}', space=sflag, size = 0x8, scoped, tag = 'scoped memory for tpu_custom_call.1']
    #allocation5 [shape = 's32[2]{0}', space=sflag, size = 0x8, scoped, tag = 'scoped memory for tpu_custom_call.1']
    #allocation6 [shape = 'u8[8192]{0}', space=vmem, size = 0x2000, scoped, tag = 'output window, operand 0']
    %21 = vsyncpa [#allocation4], 0
    %22 = vsyncpa [#allocation5], 0
    %s23 = scalar_lea.sflag [#allocation5], 1
    %24 = vsyncpa %s23, 0
    loop: start=0, step=1, limit=4
    $region2: #{tpu_custom_call.1} parent=1 // loop_pre_header
      _
    $region3: #{tpu_custom_call.1} parent=1 // loop_header
      %s26 = sphi 0, %s30
      %p27 = scmp.ge.s32.totalorder %s26, 4
      %s36 = sphi 0, %s38
      %s39 = sphi 0, %s36
      %s40 = sphi 0, %s39
      %s56 = sphi 0, %s40
      %s62 = sphi 0, %s64
      %s65 = sphi 0, %s62
      %s66 = sphi 0, %s65
      %s82 = sphi 0, %s66
      %s86 = sphi 0, %s86
      %s88 = sphi 0, %s86
      %s89 = sphi 0, %s88
      %s103 = sphi 0, %s89
      %s107 = sphi 0, %s107
      %s109 = sphi 0, %s107
      %s110 = sphi 0, %s109
      %s124 = sphi 0, %s110
      %s128 = sphi 0, %s128
      %s130 = sphi 0, %s128
      %s131 = sphi 0, %s130
      %s145 = sphi 0, %s131
      %s149 = sphi 0, %s149
      %s151 = sphi 0, %s149
      %s152 = sphi 0, %s151
      %s166 = sphi 0, %s152
      %s170 = sphi 0, %s170
      %s172 = sphi 0, %s170
      %s173 = sphi 0, %s172
      %s187 = sphi 0, %s173
      %s191 = sphi 0, %s191
      %s193 = sphi 0, %s191
      %s194 = sphi 0, %s193
      %s208 = sphi 0, %s194
      %s212 = sphi 0, %s212
      %s214 = sphi 0, %s212
      %s215 = sphi 0, %s214
      %s229 = sphi 0, %s215
      %s233 = sphi 0, %s233
      %s235 = sphi 0, %s233
      %s236 = sphi 0, %s235
      %s250 = sphi 0, %s236
      %s254 = sphi 0, %s254
      %s256 = sphi 0, %s254
      %s257 = sphi 0, %s256
      %s271 = sphi 0, %s257
      %s275 = sphi 0, %s275
      %s277 = sphi 0, %s275
      %s278 = sphi 0, %s277
      %s292 = sphi 0, %s278
      %s296 = sphi 0, %s296
      %s298 = sphi 0, %s296
      %s299 = sphi 0, %s298
      %s313 = sphi 0, %s299
      %s317 = sphi 0, %s317
      %s319 = sphi 0, %s317
      %s320 = sphi 0, %s319
      %s334 = sphi 0, %s320
      %s338 = sphi 0, %s338
      %s340 = sphi 0, %s338
      %s341 = sphi 0, %s340
      %s355 = sphi 0, %s341
      %s359 = sphi 0, %s359
      %s361 = sphi 0, %s359
      %s362 = sphi 0, %s361
      %s376 = sphi 0, %s362
      %s382 = sphi 0, %s384
      %s385 = sphi 0, %s382
      %s386 = sphi 0, %s385
      %s402 = sphi 0, %s386
    $region4: #{tpu_custom_call.1} parent=1 // loop_header_branch
      %29 = sbr.rel (%p27) target = $region8
    $region5: #{tpu_custom_call.1} parent=1 // loop_body
      %s31 = ssub.s32 %s26, 1
      %s32 = ssub.s32 %s26, 2
      %s33 = sadd.s32 %s26, 1
      %s34 = ssub.s32 %s26, %s33
      %p35 = scmp.eq.s32.totalorder %s34, 0
      %s37 = sadd.s32 %s36, 1
      %s38 = scalar_select %p35, %s36, %s37
      %p41 = pneg %p35
      %p42 = scmp.eq.s32.totalorder %s26, 1
      %p43 = por %p41, %p42
      %p44 = scmp.ne.s32.totalorder %s36, %s39
      %p45 = scmp.eq.s32.totalorder %s26, 0
      %p46 = por %p44, %p45
      %p47 = scmp.ne.s32.totalorder %s36, %s39
      %p48 = scmp.eq.s32.totalorder %s31, 1
      %p49 = por %p47, %p48
      %p50 = scmp.ne.s32.totalorder %s39, %s40
      %p51 = scmp.eq.s32.totalorder %s31, 0
      %p52 = por %p50, %p51
      %p53 = scmp.ne.s32.totalorder %s39, %s40
      %p54 = scmp.eq.s32.totalorder %s32, 1
      %p55 = por %p53, %p54
      %p57 = scmp.ne.s32.totalorder %s40, %s56
      %p58 = scmp.eq.s32.totalorder %s32, 0
      %p59 = por %p57, %p58
      %s60 = ssub.s32 %s26, %s33
      %p61 = scmp.eq.s32.totalorder %s60, 0
      %s63 = sadd.s32 %s62, 1
      %s64 = scalar_select %p61, %s62, %s63
      %p67 = pneg %p61
      %p68 = scmp.eq.s32.totalorder %s26, 1
      %p69 = por %p67, %p68
      %p70 = scmp.ne.s32.totalorder %s62, %s65
      %p71 = scmp.eq.s32.totalorder %s26, 0
      %p72 = por %p70, %p71
      %p73 = scmp.ne.s32.totalorder %s62, %s65
      %p74 = scmp.eq.s32.totalorder %s31, 1
      %p75 = por %p73, %p74
      %p76 = scmp.ne.s32.totalorder %s65, %s66
      %p77 = scmp.eq.s32.totalorder %s31, 0
      %p78 = por %p76, %p77
      %p79 = scmp.ne.s32.totalorder %s65, %s66
      %p80 = scmp.eq.s32.totalorder %s32, 1
      %p81 = por %p79, %p80
      %p83 = scmp.ne.s32.totalorder %s66, %s82
      %p84 = scmp.eq.s32.totalorder %s32, 0
      %p85 = por %p83, %p84
      %s87 = sadd.s32 %s86, 1
      %p90 = scmp.eq.s32.totalorder %s26, 1
      %p91 = scmp.ne.s32.totalorder %s86, %s88
      %p92 = scmp.eq.s32.totalorder %s26, 0
      %p93 = por %p91, %p92
      %p94 = scmp.ne.s32.totalorder %s86, %s88
      %p95 = scmp.eq.s32.totalorder %s31, 1
      %p96 = por %p94, %p95
      %p97 = scmp.ne.s32.totalorder %s88, %s89
      %p98 = scmp.eq.s32.totalorder %s31, 0
      %p99 = por %p97, %p98
      %p100 = scmp.ne.s32.totalorder %s88, %s89
      %p101 = scmp.eq.s32.totalorder %s32, 1
      %p102 = por %p100, %p101
      %p104 = scmp.ne.s32.totalorder %s89, %s103
      %p105 = scmp.eq.s32.totalorder %s32, 0
      %p106 = por %p104, %p105
      %s108 = sadd.s32 %s107, 1
      %p111 = scmp.eq.s32.totalorder %s26, 1
      %p112 = scmp.ne.s32.totalorder %s107, %s109
      %p113 = scmp.eq.s32.totalorder %s26, 0
      %p114 = por %p112, %p113
      %p115 = scmp.ne.s32.totalorder %s107, %s109
      %p116 = scmp.eq.s32.totalorder %s31, 1
      %p117 = por %p115, %p116
      %p118 = scmp.ne.s32.totalorder %s109, %s110
      %p119 = scmp.eq.s32.totalorder %s31, 0
      %p120 = por %p118, %p119
      %p121 = scmp.ne.s32.totalorder %s109, %s110
      %p122 = scmp.eq.s32.totalorder %s32, 1
      %p123 = por %p121, %p122
      %p125 = scmp.ne.s32.totalorder %s110, %s124
      %p126 = scmp.eq.s32.totalorder %s32, 0
      %p127 = por %p125, %p126
      %s129 = sadd.s32 %s128, 1
      %p132 = scmp.eq.s32.totalorder %s26, 1
      %p133 = scmp.ne.s32.totalorder %s128, %s130
      %p134 = scmp.eq.s32.totalorder %s26, 0
      %p135 = por %p133, %p134
      %p136 = scmp.ne.s32.totalorder %s128, %s130
      %p137 = scmp.eq.s32.totalorder %s31, 1
      %p138 = por %p136, %p137
      %p139 = scmp.ne.s32.totalorder %s130, %s131
      %p140 = scmp.eq.s32.totalorder %s31, 0
      %p141 = por %p139, %p140
      %p142 = scmp.ne.s32.totalorder %s130, %s131
      %p143 = scmp.eq.s32.totalorder %s32, 1
      %p144 = por %p142, %p143
      %p146 = scmp.ne.s32.totalorder %s131, %s145
      %p147 = scmp.eq.s32.totalorder %s32, 0
      %p148 = por %p146, %p147
      %s150 = sadd.s32 %s149, 1
      %p153 = scmp.eq.s32.totalorder %s26, 1
      %p154 = scmp.ne.s32.totalorder %s149, %s151
      %p155 = scmp.eq.s32.totalorder %s26, 0
      %p156 = por %p154, %p155
      %p157 = scmp.ne.s32.totalorder %s149, %s151
      %p158 = scmp.eq.s32.totalorder %s31, 1
      %p159 = por %p157, %p158
      %p160 = scmp.ne.s32.totalorder %s151, %s152
      %p161 = scmp.eq.s32.totalorder %s31, 0
      %p162 = por %p160, %p161
      %p163 = scmp.ne.s32.totalorder %s151, %s152
      %p164 = scmp.eq.s32.totalorder %s32, 1
      %p165 = por %p163, %p164
      %p167 = scmp.ne.s32.totalorder %s152, %s166
      %p168 = scmp.eq.s32.totalorder %s32, 0
      %p169 = por %p167, %p168
      %s171 = sadd.s32 %s170, 1
      %p174 = scmp.eq.s32.totalorder %s26, 1
      %p175 = scmp.ne.s32.totalorder %s170, %s172
      %p176 = scmp.eq.s32.totalorder %s26, 0
      %p177 = por %p175, %p176
      %p178 = scmp.ne.s32.totalorder %s170, %s172
      %p179 = scmp.eq.s32.totalorder %s31, 1
      %p180 = por %p178, %p179
      %p181 = scmp.ne.s32.totalorder %s172, %s173
      %p182 = scmp.eq.s32.totalorder %s31, 0
      %p183 = por %p181, %p182
      %p184 = scmp.ne.s32.totalorder %s172, %s173
      %p185 = scmp.eq.s32.totalorder %s32, 1
      %p186 = por %p184, %p185
      %p188 = scmp.ne.s32.totalorder %s173, %s187
      %p189 = scmp.eq.s32.totalorder %s32, 0
      %p190 = por %p188, %p189
      %s192 = sadd.s32 %s191, 1
      %p195 = scmp.eq.s32.totalorder %s26, 1
      %p196 = scmp.ne.s32.totalorder %s191, %s193
      %p197 = scmp.eq.s32.totalorder %s26, 0
      %p198 = por %p196, %p197
      %p199 = scmp.ne.s32.totalorder %s191, %s193
      %p200 = scmp.eq.s32.totalorder %s31, 1
      %p201 = por %p199, %p200
      %p202 = scmp.ne.s32.totalorder %s193, %s194
      %p203 = scmp.eq.s32.totalorder %s31, 0
      %p204 = por %p202, %p203
      %p205 = scmp.ne.s32.totalorder %s193, %s194
      %p206 = scmp.eq.s32.totalorder %s32, 1
      %p207 = por %p205, %p206
      %p209 = scmp.ne.s32.totalorder %s194, %s208
      %p210 = scmp.eq.s32.totalorder %s32, 0
      %p211 = por %p209, %p210
      %s213 = sadd.s32 %s212, 1
      %p216 = scmp.eq.s32.totalorder %s26, 1
      %p217 = scmp.ne.s32.totalorder %s212, %s214
      %p218 = scmp.eq.s32.totalorder %s26, 0
      %p219 = por %p217, %p218
      %p220 = scmp.ne.s32.totalorder %s212, %s214
      %p221 = scmp.eq.s32.totalorder %s31, 1
      %p222 = por %p220, %p221
      %p223 = scmp.ne.s32.totalorder %s214, %s215
      %p224 = scmp.eq.s32.totalorder %s31, 0
      %p225 = por %p223, %p224
      %p226 = scmp.ne.s32.totalorder %s214, %s215
      %p227 = scmp.eq.s32.totalorder %s32, 1
      %p228 = por %p226, %p227
      %p230 = scmp.ne.s32.totalorder %s215, %s229
      %p231 = scmp.eq.s32.totalorder %s32, 0
      %p232 = por %p230, %p231
      %s234 = sadd.s32 %s233, 1
      %p237 = scmp.eq.s32.totalorder %s26, 1
      %p238 = scmp.ne.s32.totalorder %s233, %s235
      %p239 = scmp.eq.s32.totalorder %s26, 0
      %p240 = por %p238, %p239
      %p241 = scmp.ne.s32.totalorder %s233, %s235
      %p242 = scmp.eq.s32.totalorder %s31, 1
      %p243 = por %p241, %p242
      %p244 = scmp.ne.s32.totalorder %s235, %s236
      %p245 = scmp.eq.s32.totalorder %s31, 0
      %p246 = por %p244, %p245
      %p247 = scmp.ne.s32.totalorder %s235, %s236
      %p248 = scmp.eq.s32.totalorder %s32, 1
      %p249 = por %p247, %p248
      %p251 = scmp.ne.s32.totalorder %s236, %s250
      %p252 = scmp.eq.s32.totalorder %s32, 0
      %p253 = por %p251, %p252
      %s255 = sadd.s32 %s254, 1
      %p258 = scmp.eq.s32.totalorder %s26, 1
      %p259 = scmp.ne.s32.totalorder %s254, %s256
      %p260 = scmp.eq.s32.totalorder %s26, 0
      %p261 = por %p259, %p260
      %p262 = scmp.ne.s32.totalorder %s254, %s256
      %p263 = scmp.eq.s32.totalorder %s31, 1
      %p264 = por %p262, %p263
      %p265 = scmp.ne.s32.totalorder %s256, %s257
      %p266 = scmp.eq.s32.totalorder %s31, 0
      %p267 = por %p265, %p266
      %p268 = scmp.ne.s32.totalorder %s256, %s257
      %p269 = scmp.eq.s32.totalorder %s32, 1
      %p270 = por %p268, %p269
      %p272 = scmp.ne.s32.totalorder %s257, %s271
      %p273 = scmp.eq.s32.totalorder %s32, 0
      %p274 = por %p272, %p273
      %s276 = sadd.s32 %s275, 1
      %p279 = scmp.eq.s32.totalorder %s26, 1
      %p280 = scmp.ne.s32.totalorder %s275, %s277
      %p281 = scmp.eq.s32.totalorder %s26, 0
      %p282 = por %p280, %p281
      %p283 = scmp.ne.s32.totalorder %s275, %s277
      %p284 = scmp.eq.s32.totalorder %s31, 1
      %p285 = por %p283, %p284
      %p286 = scmp.ne.s32.totalorder %s277, %s278
      %p287 = scmp.eq.s32.totalorder %s31, 0
      %p288 = por %p286, %p287
      %p289 = scmp.ne.s32.totalorder %s277, %s278
      %p290 = scmp.eq.s32.totalorder %s32, 1
      %p291 = por %p289, %p290
      %p293 = scmp.ne.s32.totalorder %s278, %s292
      %p294 = scmp.eq.s32.totalorder %s32, 0
      %p295 = por %p293, %p294
      %s297 = sadd.s32 %s296, 1
      %p300 = scmp.eq.s32.totalorder %s26, 1
      %p301 = scmp.ne.s32.totalorder %s296, %s298
      %p302 = scmp.eq.s32.totalorder %s26, 0
      %p303 = por %p301, %p302
      %p304 = scmp.ne.s32.totalorder %s296, %s298
      %p305 = scmp.eq.s32.totalorder %s31, 1
      %p306 = por %p304, %p305
      %p307 = scmp.ne.s32.totalorder %s298, %s299
      %p308 = scmp.eq.s32.totalorder %s31, 0
      %p309 = por %p307, %p308
      %p310 = scmp.ne.s32.totalorder %s298, %s299
      %p311 = scmp.eq.s32.totalorder %s32, 1
      %p312 = por %p310, %p311
      %p314 = scmp.ne.s32.totalorder %s299, %s313
      %p315 = scmp.eq.s32.totalorder %s32, 0
      %p316 = por %p314, %p315
      %s318 = sadd.s32 %s317, 1
      %p321 = scmp.eq.s32.totalorder %s26, 1
      %p322 = scmp.ne.s32.totalorder %s317, %s319
      %p323 = scmp.eq.s32.totalorder %s26, 0
      %p324 = por %p322, %p323
      %p325 = scmp.ne.s32.totalorder %s317, %s319
      %p326 = scmp.eq.s32.totalorder %s31, 1
      %p327 = por %p325, %p326
      %p328 = scmp.ne.s32.totalorder %s319, %s320
      %p329 = scmp.eq.s32.totalorder %s31, 0
      %p330 = por %p328, %p329
      %p331 = scmp.ne.s32.totalorder %s319, %s320
      %p332 = scmp.eq.s32.totalorder %s32, 1
      %p333 = por %p331, %p332
      %p335 = scmp.ne.s32.totalorder %s320, %s334
      %p336 = scmp.eq.s32.totalorder %s32, 0
      %p337 = por %p335, %p336
      %s339 = sadd.s32 %s338, 1
      %p342 = scmp.eq.s32.totalorder %s26, 1
      %p343 = scmp.ne.s32.totalorder %s338, %s340
      %p344 = scmp.eq.s32.totalorder %s26, 0
      %p345 = por %p343, %p344
      %p346 = scmp.ne.s32.totalorder %s338, %s340
      %p347 = scmp.eq.s32.totalorder %s31, 1
      %p348 = por %p346, %p347
      %p349 = scmp.ne.s32.totalorder %s340, %s341
      %p350 = scmp.eq.s32.totalorder %s31, 0
      %p351 = por %p349, %p350
      %p352 = scmp.ne.s32.totalorder %s340, %s341
      %p353 = scmp.eq.s32.totalorder %s32, 1
      %p354 = por %p352, %p353
      %p356 = scmp.ne.s32.totalorder %s341, %s355
      %p357 = scmp.eq.s32.totalorder %s32, 0
      %p358 = por %p356, %p357
      %s360 = sadd.s32 %s359, 1
      %p363 = scmp.eq.s32.totalorder %s26, 1
      %p364 = scmp.ne.s32.totalorder %s359, %s361
      %p365 = scmp.eq.s32.totalorder %s26, 0
      %p366 = por %p364, %p365
      %p367 = scmp.ne.s32.totalorder %s359, %s361
      %p368 = scmp.eq.s32.totalorder %s31, 1
      %p369 = por %p367, %p368
      %p370 = scmp.ne.s32.totalorder %s361, %s362
      %p371 = scmp.eq.s32.totalorder %s31, 0
      %p372 = por %p370, %p371
      %p373 = scmp.ne.s32.totalorder %s361, %s362
      %p374 = scmp.eq.s32.totalorder %s32, 1
      %p375 = por %p373, %p374
      %p377 = scmp.ne.s32.totalorder %s362, %s376
      %p378 = scmp.eq.s32.totalorder %s32, 0
      %p379 = por %p377, %p378
      %s380 = ssub.s32 %s26, %s33
      %p381 = scmp.eq.s32.totalorder %s380, 0
      %s383 = sadd.s32 %s382, 1
      %s384 = scalar_select %p381, %s382, %s383
      %p387 = pneg %p381
      %p388 = scmp.eq.s32.totalorder %s26, 1
      %p389 = por %p387, %p388
      %p390 = scmp.ne.s32.totalorder %s382, %s385
      %p391 = scmp.eq.s32.totalorder %s26, 0
      %p392 = por %p390, %p391
      %p393 = scmp.ne.s32.totalorder %s382, %s385
      %p394 = scmp.eq.s32.totalorder %s31, 1
      %p395 = por %p393, %p394
      %p396 = scmp.ne.s32.totalorder %s385, %s386
      %p397 = scmp.eq.s32.totalorder %s31, 0
      %p398 = por %p396, %p397
      %p399 = scmp.ne.s32.totalorder %s385, %s386
      %p400 = scmp.eq.s32.totalorder %s32, 1
      %p401 = por %p399, %p400
      %p403 = scmp.ne.s32.totalorder %s386, %s402
      %p404 = scmp.eq.s32.totalorder %s32, 0
      %p405 = por %p403, %p404
      %p406 = scmp.le.s32.totalorder 1, %s26
      %p407 = scmp.lt.s32.totalorder %s26, 3
      %p408 = pnand %p406, %p407
      %p409 = pneg %p408
      // Predicated region
      $region9: #{tpu_custom_call.1} parent=5 // pred_check
        _
      $region10: #{tpu_custom_call.1} parent=5 // pred_check_branch
        %411 = sbr.rel (%p408) target = $region12
      $region11: #{tpu_custom_call.1} parent=5 // pred_region
        %s412 = ssub.s32 %s26, 1
        // Predicated region
        $region13: #{tpu_custom_call.1} parent=11 // pred_check
          %p413 = pneg %p99
        $region14: #{tpu_custom_call.1} parent=11 // pred_check_branch
          %415 = sbr.rel (%p413) target = $region16
        $region15: #{tpu_custom_call.1} parent=11 // pred_region
          _
        $region16: #{tpu_custom_call.1} parent=11 // pred_fallthru
          _
        // Predicated region
        $region17: #{tpu_custom_call.1} parent=11 // pred_check
          %p416 = pneg %p120
        $region18: #{tpu_custom_call.1} parent=11 // pred_check_branch
          %418 = sbr.rel (%p416) target = $region20
        $region19: #{tpu_custom_call.1} parent=11 // pred_region
          _
        $region20: #{tpu_custom_call.1} parent=11 // pred_fallthru
          _
        // Predicated region
        $region21: #{tpu_custom_call.1} parent=11 // pred_check
          %p419 = pneg %p141
        $region22: #{tpu_custom_call.1} parent=11 // pred_check_branch
          %421 = sbr.rel (%p419) target = $region24
        $region23: #{tpu_custom_call.1} parent=11 // pred_region
          _
        $region24: #{tpu_custom_call.1} parent=11 // pred_fallthru
          _
        // Predicated region
        $region25: #{tpu_custom_call.1} parent=11 // pred_check
          %p422 = pneg %p162
        $region26: #{tpu_custom_call.1} parent=11 // pred_check_branch
          %424 = sbr.rel (%p422) target = $region28
        $region27: #{tpu_custom_call.1} parent=11 // pred_region
          _
        $region28: #{tpu_custom_call.1} parent=11 // pred_fallthru
          _
        // Predicated region
        $region29: #{tpu_custom_call.1} parent=11 // pred_check
          %p425 = pneg %p183
        $region30: #{tpu_custom_call.1} parent=11 // pred_check_branch
          %427 = sbr.rel (%p425) target = $region32
        $region31: #{tpu_custom_call.1} parent=11 // pred_region
          _
        $region32: #{tpu_custom_call.1} parent=11 // pred_fallthru
          _
        // Predicated region
        $region33: #{tpu_custom_call.1} parent=11 // pred_check
          %p428 = pneg %p204
        $region34: #{tpu_custom_call.1} parent=11 // pred_check_branch
          %430 = sbr.rel (%p428) target = $region36
        $region35: #{tpu_custom_call.1} parent=11 // pred_region
          _
        $region36: #{tpu_custom_call.1} parent=11 // pred_fallthru
          _
        // Predicated region
        $region37: #{tpu_custom_call.1} parent=11 // pred_check
          %p431 = pneg %p225
        $region38: #{tpu_custom_call.1} parent=11 // pred_check_branch
          %433 = sbr.rel (%p431) target = $region40
        $region39: #{tpu_custom_call.1} parent=11 // pred_region
          %s435 = ssub.s32 256, 256
          %436 = vsyncadd [#allocation4], %s435
          %s437 = sshll.u32 [#allocation3], 4
          %s438 = int_to_ptr.vmem [resolvable:$true] %s437
          %443 = dma.hbm_to_vmem [thread:$0]  %s8, 256, %s438, [#allocation4], 64, 64, 4
        $region40: #{tpu_custom_call.1} parent=11 // pred_fallthru
          _
        // Predicated region
        $region41: #{tpu_custom_call.1} parent=11 // pred_check
          %p444 = pneg %p246
        $region42: #{tpu_custom_call.1} parent=11 // pred_check_branch
          %446 = sbr.rel (%p444) target = $region44
        $region43: #{tpu_custom_call.1} parent=11 // pred_region
          _
        $region44: #{tpu_custom_call.1} parent=11 // pred_fallthru
          _
        // Predicated region
        $region45: #{tpu_custom_call.1} parent=11 // pred_check
          %p447 = pneg %p267
        $region46: #{tpu_custom_call.1} parent=11 // pred_check_branch
          %449 = sbr.rel (%p447) target = $region48
        $region47: #{tpu_custom_call.1} parent=11 // pred_region
          _
        $region48: #{tpu_custom_call.1} parent=11 // pred_fallthru
          _
        // Predicated region
        $region49: #{tpu_custom_call.1} parent=11 // pred_check
          %p450 = pneg %p288
        $region50: #{tpu_custom_call.1} parent=11 // pred_check_branch
          %452 = sbr.rel (%p450) target = $region52
        $region51: #{tpu_custom_call.1} parent=11 // pred_region
          _
        $region52: #{tpu_custom_call.1} parent=11 // pred_fallthru
          _
        // Predicated region
        $region53: #{tpu_custom_call.1} parent=11 // pred_check
          %p453 = pneg %p309
        $region54: #{tpu_custom_call.1} parent=11 // pred_check_branch
          %455 = sbr.rel (%p453) target = $region56
        $region55: #{tpu_custom_call.1} parent=11 // pred_region
          _
        $region56: #{tpu_custom_call.1} parent=11 // pred_fallthru
          _
        // Predicated region
        $region57: #{tpu_custom_call.1} parent=11 // pred_check
          %p456 = pneg %p330
        $region58: #{tpu_custom_call.1} parent=11 // pred_check_branch
          %458 = sbr.rel (%p456) target = $region60
        $region59: #{tpu_custom_call.1} parent=11 // pred_region
          _
        $region60: #{tpu_custom_call.1} parent=11 // pred_fallthru
          _
        // Predicated region
        $region61: #{tpu_custom_call.1} parent=11 // pred_check
          %p459 = pneg %p351
        $region62: #{tpu_custom_call.1} parent=11 // pred_check_branch
          %461 = sbr.rel (%p459) target = $region64
        $region63: #{tpu_custom_call.1} parent=11 // pred_region
          _
        $region64: #{tpu_custom_call.1} parent=11 // pred_fallthru
          _
        // Predicated region
        $region65: #{tpu_custom_call.1} parent=11 // pred_check
          %p462 = pneg %p372
        $region66: #{tpu_custom_call.1} parent=11 // pred_check_branch
          %464 = sbr.rel (%p462) target = $region68
        $region67: #{tpu_custom_call.1} parent=11 // pred_region
          _
        $region68: #{tpu_custom_call.1} parent=11 // pred_fallthru
          _
      $region12: #{tpu_custom_call.1} parent=5 // pred_fallthru
        _
      %p465 = scmp.lt.s32.totalorder %s26, 2
      // Predicated region
      $region69: #{tpu_custom_call.1} parent=5 // pred_check
        %p466 = pneg %p465
      $region70: #{tpu_custom_call.1} parent=5 // pred_check_branch
        %468 = sbr.rel (%p466) target = $region72
      $region71: #{tpu_custom_call.1} parent=5 // pred_region
        // Predicated region
        $region73: #{tpu_custom_call.1} parent=71 // pred_check
          %p469 = pneg %p46
        $region74: #{tpu_custom_call.1} parent=71 // pred_check_branch
          %471 = sbr.rel (%p469) target = $region76
        $region75: #{tpu_custom_call.1} parent=71 // pred_region
          %p472 = scmp.lt.s32.totalorder %s26, 1
          %s473 = scalar_select %p472, %s26, 1
          %s474 = smul.addr %s473, 8
          %s475 = scalar_lea.vmem %s0, %s474
        $region76: #{tpu_custom_call.1} parent=71 // pred_fallthru
          _
        // Predicated region
        $region77: #{tpu_custom_call.1} parent=71 // pred_check
          %p476 = pneg %p72
        $region78: #{tpu_custom_call.1} parent=71 // pred_check_branch
          %478 = sbr.rel (%p476) target = $region80
        $region79: #{tpu_custom_call.1} parent=71 // pred_region
          %p479 = scmp.lt.s32.totalorder %s26, 1
          %s480 = scalar_select %p479, %s26, 1
          %s481 = scalar_lea.vmem %s1, %s480
        $region80: #{tpu_custom_call.1} parent=71 // pred_fallthru
          _
      $region72: #{tpu_custom_call.1} parent=5 // pred_fallthru
        _
      %p482 = scmp.le.s32.totalorder 1, %s26
      %p483 = scmp.lt.s32.totalorder %s26, 3
      %p484 = pnand %p482, %p483
      %p485 = pneg %p484
      // Predicated region
      $region81: #{tpu_custom_call.1} parent=5 // pred_check
        _
      $region82: #{tpu_custom_call.1} parent=5 // pred_check_branch
        %487 = sbr.rel (%p484) target = $region84
      $region83: #{tpu_custom_call.1} parent=5 // pred_region
        %s488 = ssub.s32 %s26, 1
        // Predicated region
        $region85: #{tpu_custom_call.1} parent=83 // pred_check
          %p489 = pneg %p225
        $region86: #{tpu_custom_call.1} parent=83 // pred_check_branch
          %491 = sbr.rel (%p489) target = $region88
        $region87: #{tpu_custom_call.1} parent=83 // pred_region
          %492 = dma.done [#allocation4], 256
        $region88: #{tpu_custom_call.1} parent=83 // pred_fallthru
          _
        %p493 = scmp.lt.s32.totalorder %s31, 1
        %s494 = scalar_select %p493, %s31, 1
        %s495 = smul.addr %s494, 8
        %s496 = scalar_lea.vmem %s0, %s495
        %p497 = pneg %p52
        %p498 = pneg %p49
        %p499 = scmp.lt.s32.totalorder %s31, 1
        %s500 = scalar_select %p499, %s31, 1
        %s501 = scalar_lea.vmem %s1, %s500
        %p502 = pneg %p78
        %p503 = pneg %p75
        %p504 = pneg %p99
        %p505 = pneg %p96
        %p506 = pneg %p120
        %p507 = pneg %p117
        %p508 = pneg %p141
        %p509 = pneg %p138
        %p510 = pneg %p162
        %p511 = pneg %p159
        %p512 = pneg %p183
        %p513 = pneg %p180
        %p514 = pneg %p204
        %p515 = pneg %p201
        %p516 = pneg %p225
        %p517 = pneg %p222
        %p518 = pneg %p246
        %p519 = pneg %p243
        %p520 = pneg %p267
        %p521 = pneg %p264
        %p522 = pneg %p288
        %p523 = pneg %p285
        %p524 = pneg %p309
        %p525 = pneg %p306
        %p526 = pneg %p330
        %p527 = pneg %p327
        %p528 = pneg %p351
        %p529 = pneg %p348
        %p530 = pneg %p372
        %p531 = pneg %p369
        %p532 = pneg %p398
        %p533 = pneg %p395
        %s534 = sand.u32 %s385, 1
        %s535 = scalar_lea.sflag [#allocation5], %s534
        %s536 = sand.u32 %s385, 1
        %s537 = smul.addr %s536, 8
        %s538 = scalar_lea.vmem [#allocation6], %s537
        %p539 = scmp.lt.s32.totalorder %s31, 1
        %s540 = scalar_select %p539, %s31, 1
        %s541 = smul.addr %s540, 8
        %s542 = scalar_lea.vmem %s0, %s541
        %p543 = scmp.lt.s32.totalorder %s31, 1
        %s544 = scalar_select %p543, %s31, 1
        %s545 = scalar_lea.vmem %s1, %s544
        %v547 = vld [vmem:[%s542] sm:$0xff]
        %v548 = vld [vmem:[%s545] sm:$0x1]
        %v549 = vld [vmem:[%s6] sm:$0x1]
        %v550 = vld [vmem:[%s7] sm:$0x1]
        %vm551 = vcmask 261120
        %v552 = vsel %vm551, %v547, 0.0
        %553 = vadd.xlane.f32.xlu0 %v552
        %v554 = vpop.xlane.xlu0 %553
        %v555 = vrcp.pop 32.0
        %v556 = vmul.f32 %v554, %v555
        %v557 = vmul.f32 %v547, %v547
        %v558 = vsel %vm551, %v557, 0.0
        %559 = vadd.xlane.f32.xlu0 %v558
        %v560 = vpop.xlane.xlu0 %559
        %v561 = vmul.f32 %v560, %v555
        %v562 = vmul.f32 %v556, %v556
        %v563 = vsub.f32 %v561, %v562
        %v564 = vsub.f32 %v547, %v556
        %v565 = vadd.f32 %v563, 1e-05
        %v566 = vrsqrt.pop %v565
        %v567 = vmul.f32 %v564, %v566
        %v569 = vlaneseq
        %v570 = vshrl.u32 %v569, 7
        %v571 = vsub.s32 0, %v570
        %v572 = vrot.slane %v549, %v571
        %v574 = vmul.f32 %v567, %v572
        %v576 = vlaneseq
        %v577 = vshrl.u32 %v576, 7
        %v578 = vsub.s32 0, %v577
        %v579 = vrot.slane %v550, %v578
        %v581 = vadd.f32 %v574, %v579
        %v582 = vpack.c.bf16 %v581, %v581
        %v583 = vld [vmem:[%s2] sm:$0xf]
        %v584 = vld [vmem:[%s2 + $0x4] sm:$0xf]
        %v585 = vld [vmem:[%s2 + $0x8] sm:$0xf]
        %v586 = vld [vmem:[%s2 + $0xc] sm:$0xf]
        %v587 = vld [vmem:[%s3] sm:$0x1]
        %v589 = vlaneseq
        %v590 = vshrl.u32 %v589, 7
        %v591 = vsub.s32 0, %v590
        %v592 = vrot.slane %v587, %v591
        %v598 = vunpack.c.l.b16 %v583
        %v599 = vunpack.c.l.b16 %v584
        %v600 = vunpack.c.l.b16 %v585
        %v601 = vunpack.c.l.b16 %v586
        %v602 = vpack.c.b16 %v599, %v598
        %v603 = vpack.c.b16 %v601, %v600
        %v607 = vsel %vm551, %v582, 0
        %609 = vmatprep.subr.bf16.mxu0 0
        %610 = vmatpush1.bf16.msra.mxu0 %v602
        %611 = vmatprep.subr.bf16.mxu0 0
        %612 = vmatpush1.bf16.msra.mxu0 %v603
        %613 = vmatprep.subr.bf16.mxu0 0
        %614 = vmatpush1.bf16.msra.mxu0 0
        %615 = vmatprep.subr.bf16.mxu0 0
        %616 = vmatpush1.bf16.msra.mxu0 0
        %617 = vmatprep.subr.bf16.mxu0 0
        %618 = vmatpush1.bf16.msra.mxu0 0
        %619 = vmatprep.subr.bf16.mxu0 0
        %620 = vmatpush1.bf16.msra.mxu0 0
        %621 = vmatprep.subr.bf16.mxu0 0
        %622 = vmatpush1.bf16.msra.mxu0 0
        %623 = vmatprep.subr.bf16.mxu0 0
        %624 = vmatpush1.bf16.msra.mxu0 0
        %625 = vmatprep.subr.bf16.mxu0 0
        %626 = vmatpush1.bf16.msra.mxu0 0
        %627 = vmatprep.subr.bf16.mxu0 0
        %628 = vmatpush1.bf16.msra.mxu0 0
        %629 = vmatprep.subr.bf16.mxu0 0
        %630 = vmatpush1.bf16.msra.mxu0 0
        %631 = vmatprep.subr.bf16.mxu0 0
        %632 = vmatpush1.bf16.msra.mxu0 0
        %633 = vmatprep.subr.bf16.mxu0 0
        %634 = vmatpush1.bf16.msra.mxu0 0
        %635 = vmatprep.subr.bf16.mxu0 0
        %636 = vmatpush1.bf16.msra.mxu0 0
        %637 = vmatprep.subr.bf16.mxu0 0
        %638 = vmatpush1.bf16.msra.mxu0 0
        %639 = vmatprep.subr.bf16.mxu0 0
        %640 = vmatpush1.bf16.msra.mxu0 0
        %641 = vmatprep.mubr.bf16.mxu0 0
        %642 = vmatmul.mubr.bf16.gmra.mrb[0].mxu0 %v607
        %v643 = vpop.f32.mrb[0].mxu0
        %v644 = vadd.f32 %v592, %v643
        %v645 = vpop.f32.mrb[0].mxu0
        %v646 = vpop.f32.mrb[0].mxu0
        %v647 = vpop.f32.mrb[0].mxu0
        %648 = vdwg.mxu0
        %v649 = vmul.f32 %v644, 0.35355338
        %v650 = vpack.c.bf16 %v649, %v649
        %v651 = vpack.c.bf16 %v644, %v644
        %v653 = vlaneseq
        %v654 = vshrl.u32 %v653, 7
        %v655 = vsub.s32 0, %v654
        %v656 = vrot.slane %v548, %v655
        %659 = vrot.lane.b32.xlu0 %v651, 96
        %v660 = vpop.permute.xlu0 %659
        %vm661 = vcmask 64512
        %v663 = vsel %vm661, %v650, 0
        %v666 = vsel %vm661, %v660, 0
        %668 = vmatprep.subr.bf16.mxu0 0
        %669 = vmatpush1.bf16.xpose.msra.mxu0 %v666
        %670 = vmatprep.subr.bf16.mxu0 0
        %671 = vmatpush1.bf16.xpose.msra.mxu0 0
        %672 = vmatprep.subr.bf16.mxu0 0
        %673 = vmatpush1.bf16.xpose.msra.mxu0 0
        %674 = vmatprep.subr.bf16.mxu0 0
        %675 = vmatpush1.bf16.xpose.msra.mxu0 0
        %676 = vmatprep.subr.bf16.mxu0 0
        %677 = vmatpush1.bf16.xpose.msra.mxu0 0
        %678 = vmatprep.subr.bf16.mxu0 0
        %679 = vmatpush1.bf16.xpose.msra.mxu0 0
        %680 = vmatprep.subr.bf16.mxu0 0
        %681 = vmatpush1.bf16.xpose.msra.mxu0 0
        %682 = vmatprep.subr.bf16.mxu0 0
        %683 = vmatpush1.bf16.xpose.msra.mxu0 0
        %684 = vmatprep.subr.bf16.mxu0 0
        %685 = vmatpush1.bf16.xpose.msra.mxu0 0
        %686 = vmatprep.subr.bf16.mxu0 0
        %687 = vmatpush1.bf16.xpose.msra.mxu0 0
        %688 = vmatprep.subr.bf16.mxu0 0
        %689 = vmatpush1.bf16.xpose.msra.mxu0 0
        %690 = vmatprep.subr.bf16.mxu0 0
        %691 = vmatpush1.bf16.xpose.msra.mxu0 0
        %692 = vmatprep.subr.bf16.mxu0 0
        %693 = vmatpush1.bf16.xpose.msra.mxu0 0
        %694 = vmatprep.subr.bf16.mxu0 0
        %695 = vmatpush1.bf16.xpose.msra.mxu0 0
        %696 = vmatprep.subr.bf16.mxu0 0
        %697 = vmatpush1.bf16.xpose.msra.mxu0 0
        %698 = vmatprep.subr.bf16.mxu0 0
        %699 = vmatpush1.bf16.xpose.msra.mxu0 0
        %700 = vmatprep.mubr.bf16.mxu0 0
        %701 = vmatmul.mubr.bf16.gmra.mrb[0].mxu0 %v663
        %v702 = vpop.f32.mrb[0].mxu0
        %v703 = vadd.f32 %v656, %v702
        %v704 = vpop.f32.mrb[0].mxu0
        %v705 = vpop.f32.mrb[0].mxu0
        %v706 = vpop.f32.mrb[0].mxu0
        %707 = vdwg.mxu0
        %v708 = vsel %vm661, %v703, -inf
        %709 = vmax.xlane.f32.xlu0 %v708
        %v710 = vpop.xlane.xlu0 %709
        %v711 = vsub.f32 %v703, %v710
        %v712 = vmul.f32 %v711, 1.442695
        %v713 = vpow.pop %v712
        %v714 = vsel %vm661, %v713, 0.0
        %715 = vadd.xlane.f32.xlu0 %v714
        %v716 = vpop.xlane.xlu0 %715
        %v717 = vrcp.pop %v716
        %v718 = vmul.f32 %v713, %v717
        %v719 = vpack.c.bf16 %v718, %v718
        %720 = vrot.lane.b32.xlu0 %v651, 64
        %v721 = vpop.permute.xlu0 %720
        %v723 = vsel %vm661, %v719, 0
        %vm725 = vcmask 1043456
        %v727 = vsel %vm725, %v721, 0
        %729 = vmatprep.subr.bf16.mxu0 0
        %730 = vmatpush1.bf16.msra.mxu0 %v727
        %731 = vmatprep.subr.bf16.mxu0 0
        %732 = vmatpush1.bf16.msra.mxu0 0
        %733 = vmatprep.subr.bf16.mxu0 0
        %734 = vmatpush1.bf16.msra.mxu0 0
        %735 = vmatprep.subr.bf16.mxu0 0
        %736 = vmatpush1.bf16.msra.mxu0 0
        %737 = vmatprep.subr.bf16.mxu0 0
        %738 = vmatpush1.bf16.msra.mxu0 0
        %739 = vmatprep.subr.bf16.mxu0 0
        %740 = vmatpush1.bf16.msra.mxu0 0
        %741 = vmatprep.subr.bf16.mxu0 0
        %742 = vmatpush1.bf16.msra.mxu0 0
        %743 = vmatprep.subr.bf16.mxu0 0
        %744 = vmatpush1.bf16.msra.mxu0 0
        %745 = vmatprep.subr.bf16.mxu0 0
        %746 = vmatpush1.bf16.msra.mxu0 0
        %747 = vmatprep.subr.bf16.mxu0 0
        %748 = vmatpush1.bf16.msra.mxu0 0
        %749 = vmatprep.subr.bf16.mxu0 0
        %750 = vmatpush1.bf16.msra.mxu0 0
        %751 = vmatprep.subr.bf16.mxu0 0
        %752 = vmatpush1.bf16.msra.mxu0 0
        %753 = vmatprep.subr.bf16.mxu0 0
        %754 = vmatpush1.bf16.msra.mxu0 0
        %755 = vmatprep.subr.bf16.mxu0 0
        %756 = vmatpush1.bf16.msra.mxu0 0
        %757 = vmatprep.subr.bf16.mxu0 0
        %758 = vmatpush1.bf16.msra.mxu0 0
        %759 = vmatprep.subr.bf16.mxu0 0
        %760 = vmatpush1.bf16.msra.mxu0 0
        %761 = vmatprep.mubr.bf16.mxu0 0
        %762 = vmatmul.mubr.bf16.gmra.mrb[0].mxu0 %v723
        %v763 = vpop.f32.mrb[0].mxu0
        %v764 = vadd.f32 0.0, %v763
        %v765 = vpop.f32.mrb[0].mxu0
        %v766 = vpop.f32.mrb[0].mxu0
        %v767 = vpop.f32.mrb[0].mxu0
        %768 = vdwg.mxu0
        %769 = vst.msk [vmem:[#allocation2] sm:$0xff] %vm661, %v764
        %771 = vrot.lane.b32.xlu0 %v650, 120
        %v772 = vpop.permute.xlu0 %771
        %773 = vrot.lane.b32.xlu0 %v651, 88
        %v774 = vpop.permute.xlu0 %773
        %v776 = vsel %vm661, %v772, 0
        %v779 = vsel %vm661, %v774, 0
        %781 = vmatprep.subr.bf16.mxu0 0
        %782 = vmatpush1.bf16.xpose.msra.mxu0 %v779
        %783 = vmatprep.subr.bf16.mxu0 0
        %784 = vmatpush1.bf16.xpose.msra.mxu0 0
        %785 = vmatprep.subr.bf16.mxu0 0
        %786 = vmatpush1.bf16.xpose.msra.mxu0 0
        %787 = vmatprep.subr.bf16.mxu0 0
        %788 = vmatpush1.bf16.xpose.msra.mxu0 0
        %789 = vmatprep.subr.bf16.mxu0 0
        %790 = vmatpush1.bf16.xpose.msra.mxu0 0
        %791 = vmatprep.subr.bf16.mxu0 0
        %792 = vmatpush1.bf16.xpose.msra.mxu0 0
        %793 = vmatprep.subr.bf16.mxu0 0
        %794 = vmatpush1.bf16.xpose.msra.mxu0 0
        %795 = vmatprep.subr.bf16.mxu0 0
        %796 = vmatpush1.bf16.xpose.msra.mxu0 0
        %797 = vmatprep.subr.bf16.mxu0 0
        %798 = vmatpush1.bf16.xpose.msra.mxu0 0
        %799 = vmatprep.subr.bf16.mxu0 0
        %800 = vmatpush1.bf16.xpose.msra.mxu0 0
        %801 = vmatprep.subr.bf16.mxu0 0
        %802 = vmatpush1.bf16.xpose.msra.mxu0 0
        %803 = vmatprep.subr.bf16.mxu0 0
        %804 = vmatpush1.bf16.xpose.msra.mxu0 0
        %805 = vmatprep.subr.bf16.mxu0 0
        %806 = vmatpush1.bf16.xpose.msra.mxu0 0
        %807 = vmatprep.subr.bf16.mxu0 0
        %808 = vmatpush1.bf16.xpose.msra.mxu0 0
        %809 = vmatprep.subr.bf16.mxu0 0
        %810 = vmatpush1.bf16.xpose.msra.mxu0 0
        %811 = vmatprep.subr.bf16.mxu0 0
        %812 = vmatpush1.bf16.xpose.msra.mxu0 0
        %813 = vmatprep.mubr.bf16.mxu0 0
        %814 = vmatmul.mubr.bf16.gmra.mrb[0].mxu0 %v776
        %v815 = vpop.f32.mrb[0].mxu0
        %v816 = vadd.f32 %v656, %v815
        %v817 = vpop.f32.mrb[0].mxu0
        %v818 = vpop.f32.mrb[0].mxu0
        %v819 = vpop.f32.mrb[0].mxu0
        %820 = vdwg.mxu0
        %v821 = vsel %vm661, %v816, -inf
        %822 = vmax.xlane.f32.xlu0 %v821
        %v823 = vpop.xlane.xlu0 %822
        %v824 = vsub.f32 %v816, %v823
        %v825 = vmul.f32 %v824, 1.442695
        %v826 = vpow.pop %v825
        %v827 = vsel %vm661, %v826, 0.0
        %828 = vadd.xlane.f32.xlu0 %v827
        %v829 = vpop.xlane.xlu0 %828
        %v830 = vrcp.pop %v829
        %v831 = vmul.f32 %v826, %v830
        %v832 = vpack.c.bf16 %v831, %v831
        %833 = vrot.lane.b32.xlu0 %v651, 56
        %v834 = vpop.permute.xlu0 %833
        %v836 = vsel %vm661, %v832, 0
        %v839 = vsel %vm725, %v834, 0
        %841 = vmatprep.subr.bf16.mxu0 0
        %842 = vmatpush1.bf16.msra.mxu0 %v839
        %843 = vmatprep.subr.bf16.mxu0 0
        %844 = vmatpush1.bf16.msra.mxu0 0
        %845 = vmatprep.subr.bf16.mxu0 0
        %846 = vmatpush1.bf16.msra.mxu0 0
        %847 = vmatprep.subr.bf16.mxu0 0
        %848 = vmatpush1.bf16.msra.mxu0 0
        %849 = vmatprep.subr.bf16.mxu0 0
        %850 = vmatpush1.bf16.msra.mxu0 0
        %851 = vmatprep.subr.bf16.mxu0 0
        %852 = vmatpush1.bf16.msra.mxu0 0
        %853 = vmatprep.subr.bf16.mxu0 0
        %854 = vmatpush1.bf16.msra.mxu0 0
        %855 = vmatprep.subr.bf16.mxu0 0
        %856 = vmatpush1.bf16.msra.mxu0 0
        %857 = vmatprep.subr.bf16.mxu0 0
        %858 = vmatpush1.bf16.msra.mxu0 0
        %859 = vmatprep.subr.bf16.mxu0 0
        %860 = vmatpush1.bf16.msra.mxu0 0
        %861 = vmatprep.subr.bf16.mxu0 0
        %862 = vmatpush1.bf16.msra.mxu0 0
        %863 = vmatprep.subr.bf16.mxu0 0
        %864 = vmatpush1.bf16.msra.mxu0 0
        %865 = vmatprep.subr.bf16.mxu0 0
        %866 = vmatpush1.bf16.msra.mxu0 0
        %867 = vmatprep.subr.bf16.mxu0 0
        %868 = vmatpush1.bf16.msra.mxu0 0
        %869 = vmatprep.subr.bf16.mxu0 0
        %870 = vmatpush1.bf16.msra.mxu0 0
        %871 = vmatprep.subr.bf16.mxu0 0
        %872 = vmatpush1.bf16.msra.mxu0 0
        %873 = vmatprep.mubr.bf16.mxu0 0
        %874 = vmatmul.mubr.bf16.gmra.mrb[0].mxu0 %v836
        %v875 = vpop.f32.mrb[0].mxu0
        %v876 = vadd.f32 0.0, %v875
        %v877 = vpop.f32.mrb[0].mxu0
        %v878 = vpop.f32.mrb[0].mxu0
        %v879 = vpop.f32.mrb[0].mxu0
        %880 = vdwg.mxu0
        %882 = vrot.lane.b32.xlu0 %v876, 8
        %v883 = vpop.permute.xlu0 %882
        %vm885 = vcmask 130112
        %886 = vst.msk [vmem:[#allocation2] sm:$0xff] %vm885, %v883
        %887 = vrot.lane.b32.xlu0 %v650, 112
        %v888 = vpop.permute.xlu0 %887
        %889 = vrot.lane.b32.xlu0 %v651, 80
        %v890 = vpop.permute.xlu0 %889
        %v892 = vsel %vm661, %v888, 0
        %v895 = vsel %vm661, %v890, 0
        %897 = vmatprep.subr.bf16.mxu0 0
        %898 = vmatpush1.bf16.xpose.msra.mxu0 %v895
        %899 = vmatprep.subr.bf16.mxu0 0
        %900 = vmatpush1.bf16.xpose.msra.mxu0 0
        %901 = vmatprep.subr.bf16.mxu0 0
        %902 = vmatpush1.bf16.xpose.msra.mxu0 0
        %903 = vmatprep.subr.bf16.mxu0 0
        %904 = vmatpush1.bf16.xpose.msra.mxu0 0
        %905 = vmatprep.subr.bf16.mxu0 0
        %906 = vmatpush1.bf16.xpose.msra.mxu0 0
        %907 = vmatprep.subr.bf16.mxu0 0
        %908 = vmatpush1.bf16.xpose.msra.mxu0 0
        %909 = vmatprep.subr.bf16.mxu0 0
        %910 = vmatpush1.bf16.xpose.msra.mxu0 0
        %911 = vmatprep.subr.bf16.mxu0 0
        %912 = vmatpush1.bf16.xpose.msra.mxu0 0
        %913 = vmatprep.subr.bf16.mxu0 0
        %914 = vmatpush1.bf16.xpose.msra.mxu0 0
        %915 = vmatprep.subr.bf16.mxu0 0
        %916 = vmatpush1.bf16.xpose.msra.mxu0 0
        %917 = vmatprep.subr.bf16.mxu0 0
        %918 = vmatpush1.bf16.xpose.msra.mxu0 0
        %919 = vmatprep.subr.bf16.mxu0 0
        %920 = vmatpush1.bf16.xpose.msra.mxu0 0
        %921 = vmatprep.subr.bf16.mxu0 0
        %922 = vmatpush1.bf16.xpose.msra.mxu0 0
        %923 = vmatprep.subr.bf16.mxu0 0
        %924 = vmatpush1.bf16.xpose.msra.mxu0 0
        %925 = vmatprep.subr.bf16.mxu0 0
        %926 = vmatpush1.bf16.xpose.msra.mxu0 0
        %927 = vmatprep.subr.bf16.mxu0 0
        %928 = vmatpush1.bf16.xpose.msra.mxu0 0
        %929 = vmatprep.mubr.bf16.mxu0 0
        %930 = vmatmul.mubr.bf16.gmra.mrb[0].mxu0 %v892
        %v931 = vpop.f32.mrb[0].mxu0
        %v932 = vadd.f32 %v656, %v931
        %v933 = vpop.f32.mrb[0].mxu0
        %v934 = vpop.f32.mrb[0].mxu0
        %v935 = vpop.f32.mrb[0].mxu0
        %936 = vdwg.mxu0
        %v937 = vsel %vm661, %v932, -inf
        %938 = vmax.xlane.f32.xlu0 %v937
        %v939 = vpop.xlane.xlu0 %938
        %v940 = vsub.f32 %v932, %v939
        %v941 = vmul.f32 %v940, 1.442695
        %v942 = vpow.pop %v941
        %v943 = vsel %vm661, %v942, 0.0
        %944 = vadd.xlane.f32.xlu0 %v943
        %v945 = vpop.xlane.xlu0 %944
        %v946 = vrcp.pop %v945
        %v947 = vmul.f32 %v942, %v946
        %v948 = vpack.c.bf16 %v947, %v947
        %949 = vrot.lane.b32.xlu0 %v651, 48
        %v950 = vpop.permute.xlu0 %949
        %v952 = vsel %vm661, %v948, 0
        %v955 = vsel %vm725, %v950, 0
        %957 = vmatprep.subr.bf16.mxu0 0
        %958 = vmatpush1.bf16.msra.mxu0 %v955
        %959 = vmatprep.subr.bf16.mxu0 0
        %960 = vmatpush1.bf16.msra.mxu0 0
        %961 = vmatprep.subr.bf16.mxu0 0
        %962 = vmatpush1.bf16.msra.mxu0 0
        %963 = vmatprep.subr.bf16.mxu0 0
        %964 = vmatpush1.bf16.msra.mxu0 0
        %965 = vmatprep.subr.bf16.mxu0 0
        %966 = vmatpush1.bf16.msra.mxu0 0
        %967 = vmatprep.subr.bf16.mxu0 0
        %968 = vmatpush1.bf16.msra.mxu0 0
        %969 = vmatprep.subr.bf16.mxu0 0
        %970 = vmatpush1.bf16.msra.mxu0 0
        %971 = vmatprep.subr.bf16.mxu0 0
        %972 = vmatpush1.bf16.msra.mxu0 0
        %973 = vmatprep.subr.bf16.mxu0 0
        %974 = vmatpush1.bf16.msra.mxu0 0
        %975 = vmatprep.subr.bf16.mxu0 0
        %976 = vmatpush1.bf16.msra.mxu0 0
        %977 = vmatprep.subr.bf16.mxu0 0
        %978 = vmatpush1.bf16.msra.mxu0 0
        %979 = vmatprep.subr.bf16.mxu0 0
        %980 = vmatpush1.bf16.msra.mxu0 0
        %981 = vmatprep.subr.bf16.mxu0 0
        %982 = vmatpush1.bf16.msra.mxu0 0
        %983 = vmatprep.subr.bf16.mxu0 0
        %984 = vmatpush1.bf16.msra.mxu0 0
        %985 = vmatprep.subr.bf16.mxu0 0
        %986 = vmatpush1.bf16.msra.mxu0 0
        %987 = vmatprep.subr.bf16.mxu0 0
        %988 = vmatpush1.bf16.msra.mxu0 0
        %989 = vmatprep.mubr.bf16.mxu0 0
        %990 = vmatmul.mubr.bf16.gmra.mrb[0].mxu0 %v952
        %v991 = vpop.f32.mrb[0].mxu0
        %v992 = vadd.f32 0.0, %v991
        %v993 = vpop.f32.mrb[0].mxu0
        %v994 = vpop.f32.mrb[0].mxu0
        %v995 = vpop.f32.mrb[0].mxu0
        %996 = vdwg.mxu0
        %998 = vrot.lane.b32.xlu0 %v992, 16
        %v999 = vpop.permute.xlu0 %998
        %vm1001 = vcmask 195712
        %1002 = vst.msk [vmem:[#allocation2] sm:$0xff] %vm1001, %v999
        %1003 = vrot.lane.b32.xlu0 %v650, 104
        %v1004 = vpop.permute.xlu0 %1003
        %1005 = vrot.lane.b32.xlu0 %v651, 72
        %v1006 = vpop.permute.xlu0 %1005
        %v1008 = vsel %vm661, %v1004, 0
        %v1011 = vsel %vm661, %v1006, 0
        %1013 = vmatprep.subr.bf16.mxu0 0
        %1014 = vmatpush1.bf16.xpose.msra.mxu0 %v1011
        %1015 = vmatprep.subr.bf16.mxu0 0
        %1016 = vmatpush1.bf16.xpose.msra.mxu0 0
        %1017 = vmatprep.subr.bf16.mxu0 0
        %1018 = vmatpush1.bf16.xpose.msra.mxu0 0
        %1019 = vmatprep.subr.bf16.mxu0 0
        %1020 = vmatpush1.bf16.xpose.msra.mxu0 0
        %1021 = vmatprep.subr.bf16.mxu0 0
        %1022 = vmatpush1.bf16.xpose.msra.mxu0 0
        %1023 = vmatprep.subr.bf16.mxu0 0
        %1024 = vmatpush1.bf16.xpose.msra.mxu0 0
        %1025 = vmatprep.subr.bf16.mxu0 0
        %1026 = vmatpush1.bf16.xpose.msra.mxu0 0
        %1027 = vmatprep.subr.bf16.mxu0 0
        %1028 = vmatpush1.bf16.xpose.msra.mxu0 0
        %1029 = vmatprep.subr.bf16.mxu0 0
        %1030 = vmatpush1.bf16.xpose.msra.mxu0 0
        %1031 = vmatprep.subr.bf16.mxu0 0
        %1032 = vmatpush1.bf16.xpose.msra.mxu0 0
        %1033 = vmatprep.subr.bf16.mxu0 0
        %1034 = vmatpush1.bf16.xpose.msra.mxu0 0
        %1035 = vmatprep.subr.bf16.mxu0 0
        %1036 = vmatpush1.bf16.xpose.msra.mxu0 0
        %1037 = vmatprep.subr.bf16.mxu0 0
        %1038 = vmatpush1.bf16.xpose.msra.mxu0 0
        %1039 = vmatprep.subr.bf16.mxu0 0
        %1040 = vmatpush1.bf16.xpose.msra.mxu0 0
        %1041 = vmatprep.subr.bf16.mxu0 0
        %1042 = vmatpush1.bf16.xpose.msra.mxu0 0
        %1043 = vmatprep.subr.bf16.mxu0 0
        %1044 = vmatpush1.bf16.xpose.msra.mxu0 0
        %1045 = vmatprep.mubr.bf16.mxu0 0
        %1046 = vmatmul.mubr.bf16.gmra.mrb[0].mxu0 %v1008
        %v1047 = vpop.f32.mrb[0].mxu0
        %v1048 = vadd.f32 %v656, %v1047
        %v1049 = vpop.f32.mrb[0].mxu0
        %v1050 = vpop.f32.mrb[0].mxu0
        %v1051 = vpop.f32.mrb[0].mxu0
        %1052 = vdwg.mxu0
        %v1053 = vsel %vm661, %v1048, -inf
        %1054 = vmax.xlane.f32.xlu0 %v1053
        %v1055 = vpop.xlane.xlu0 %1054
        %v1056 = vsub.f32 %v1048, %v1055
        %v1057 = vmul.f32 %v1056, 1.442695
        %v1058 = vpow.pop %v1057
        %v1059 = vsel %vm661, %v1058, 0.0
        %1060 = vadd.xlane.f32.xlu0 %v1059
        %v1061 = vpop.xlane.xlu0 %1060
        %v1062 = vrcp.pop %v1061
        %v1063 = vmul.f32 %v1058, %v1062
        %v1064 = vpack.c.bf16 %v1063, %v1063
        %1065 = vrot.lane.b32.xlu0 %v651, 40
        %v1066 = vpop.permute.xlu0 %1065
        %v1068 = vsel %vm661, %v1064, 0
        %v1071 = vsel %vm725, %v1066, 0
        %1073 = vmatprep.subr.bf16.mxu0 0
        %1074 = vmatpush1.bf16.msra.mxu0 %v1071
        %1075 = vmatprep.subr.bf16.mxu0 0
        %1076 = vmatpush1.bf16.msra.mxu0 0
        %1077 = vmatprep.subr.bf16.mxu0 0
        %1078 = vmatpush1.bf16.msra.mxu0 0
        %1079 = vmatprep.subr.bf16.mxu0 0
        %1080 = vmatpush1.bf16.msra.mxu0 0
        %1081 = vmatprep.subr.bf16.mxu0 0
        %1082 = vmatpush1.bf16.msra.mxu0 0
        %1083 = vmatprep.subr.bf16.mxu0 0
        %1084 = vmatpush1.bf16.msra.mxu0 0
        %1085 = vmatprep.subr.bf16.mxu0 0
        %1086 = vmatpush1.bf16.msra.mxu0 0
        %1087 = vmatprep.subr.bf16.mxu0 0
        %1088 = vmatpush1.bf16.msra.mxu0 0
        %1089 = vmatprep.subr.bf16.mxu0 0
        %1090 = vmatpush1.bf16.msra.mxu0 0
        %1091 = vmatprep.subr.bf16.mxu0 0
        %1092 = vmatpush1.bf16.msra.mxu0 0
        %1093 = vmatprep.subr.bf16.mxu0 0
        %1094 = vmatpush1.bf16.msra.mxu0 0
        %1095 = vmatprep.subr.bf16.mxu0 0
        %1096 = vmatpush1.bf16.msra.mxu0 0
        %1097 = vmatprep.subr.bf16.mxu0 0
        %1098 = vmatpush1.bf16.msra.mxu0 0
        %1099 = vmatprep.subr.bf16.mxu0 0
        %1100 = vmatpush1.bf16.msra.mxu0 0
        %1101 = vmatprep.subr.bf16.mxu0 0
        %1102 = vmatpush1.bf16.msra.mxu0 0
        %1103 = vmatprep.subr.bf16.mxu0 0
        %1104 = vmatpush1.bf16.msra.mxu0 0
        %1105 = vmatprep.mubr.bf16.mxu0 0
        %1106 = vmatmul.mubr.bf16.gmra.mrb[0].mxu0 %v1068
        %v1107 = vpop.f32.mrb[0].mxu0
        %v1108 = vadd.f32 0.0, %v1107
        %v1109 = vpop.f32.mrb[0].mxu0
        %v1110 = vpop.f32.mrb[0].mxu0
        %v1111 = vpop.f32.mrb[0].mxu0
        %1112 = vdwg.mxu0
        %1114 = vrot.lane.b32.xlu0 %v1108, 24
        %v1115 = vpop.permute.xlu0 %1114
        %vm1117 = vcmask 261312
        %1118 = vst.msk [vmem:[#allocation2] sm:$0xff] %vm1117, %v1115
        %v1119 = vld [vmem:[#allocation2] sm:$0xff]
        %v1120 = vpack.c.bf16 %v1119, %v1119
        %v1121 = vld [vmem:[%s4] sm:$0xf]
        %v1122 = vld [vmem:[%s4 + $0x4] sm:$0xf]
        %v1123 = vld [vmem:[%s4 + $0x8] sm:$0xf]
        %v1124 = vld [vmem:[%s4 + $0xc] sm:$0xf]
        %v1125 = vld [vmem:[%s5] sm:$0x1]
        %v1127 = vlaneseq
        %v1128 = vshrl.u32 %v1127, 7
        %v1129 = vsub.s32 0, %v1128
        %v1130 = vrot.slane %v1125, %v1129
        %v1136 = vunpack.c.l.b16 %v1121
        %v1137 = vunpack.c.l.b16 %v1122
        %v1138 = vunpack.c.l.b16 %v1123
        %v1139 = vunpack.c.l.b16 %v1124
        %v1140 = vpack.c.b16 %v1137, %v1136
        %v1141 = vpack.c.b16 %v1139, %v1138
        %v1145 = vsel %vm551, %v1120, 0
        %1147 = vmatprep.subr.bf16.mxu0 0
        %1148 = vmatpush1.bf16.msra.mxu0 %v1140
        %1149 = vmatprep.subr.bf16.mxu0 0
        %1150 = vmatpush1.bf16.msra.mxu0 %v1141
        %1151 = vmatprep.subr.bf16.mxu0 0
        %1152 = vmatpush1.bf16.msra.mxu0 0
        %1153 = vmatprep.subr.bf16.mxu0 0
        %1154 = vmatpush1.bf16.msra.mxu0 0
        %1155 = vmatprep.subr.bf16.mxu0 0
        %1156 = vmatpush1.bf16.msra.mxu0 0
        %1157 = vmatprep.subr.bf16.mxu0 0
        %1158 = vmatpush1.bf16.msra.mxu0 0
        %1159 = vmatprep.subr.bf16.mxu0 0
        %1160 = vmatpush1.bf16.msra.mxu0 0
        %1161 = vmatprep.subr.bf16.mxu0 0
        %1162 = vmatpush1.bf16.msra.mxu0 0
        %1163 = vmatprep.subr.bf16.mxu0 0
        %1164 = vmatpush1.bf16.msra.mxu0 0
        %1165 = vmatprep.subr.bf16.mxu0 0
        %1166 = vmatpush1.bf16.msra.mxu0 0
        %1167 = vmatprep.subr.bf16.mxu0 0
        %1168 = vmatpush1.bf16.msra.mxu0 0
        %1169 = vmatprep.subr.bf16.mxu0 0
        %1170 = vmatpush1.bf16.msra.mxu0 0
        %1171 = vmatprep.subr.bf16.mxu0 0
        %1172 = vmatpush1.bf16.msra.mxu0 0
        %1173 = vmatprep.subr.bf16.mxu0 0
        %1174 = vmatpush1.bf16.msra.mxu0 0
        %1175 = vmatprep.subr.bf16.mxu0 0
        %1176 = vmatpush1.bf16.msra.mxu0 0
        %1177 = vmatprep.subr.bf16.mxu0 0
        %1178 = vmatpush1.bf16.msra.mxu0 0
        %1179 = vmatprep.mubr.bf16.mxu0 0
        %1180 = vmatmul.mubr.bf16.gmra.mrb[0].mxu0 %v1145
        %v1181 = vpop.f32.mrb[0].mxu0
        %v1182 = vadd.f32 %v1130, %v1181
        %v1183 = vpop.f32.mrb[0].mxu0
        %v1184 = vpop.f32.mrb[0].mxu0
        %v1185 = vpop.f32.mrb[0].mxu0
        %1186 = vdwg.mxu0
        %v1187 = vadd.f32 %v547, %v1182
        %v1188 = vld [vmem:[%s12] sm:$0x1]
        %v1189 = vld [vmem:[%s13] sm:$0x1]
        %v1190 = vsel %vm551, %v1187, 0.0
        %1191 = vadd.xlane.f32.xlu0 %v1190
        %v1192 = vpop.xlane.xlu0 %1191
        %v1193 = vmul.f32 %v1192, %v555
        %v1194 = vmul.f32 %v1187, %v1187
        %v1195 = vsel %vm551, %v1194, 0.0
        %1196 = vadd.xlane.f32.xlu0 %v1195
        %v1197 = vpop.xlane.xlu0 %1196
        %v1198 = vmul.f32 %v1197, %v555
        %v1199 = vmul.f32 %v1193, %v1193
        %v1200 = vsub.f32 %v1198, %v1199
        %v1201 = vsub.f32 %v1187, %v1193
        %v1202 = vadd.f32 %v1200, 1e-05
        %v1203 = vrsqrt.pop %v1202
        %v1204 = vmul.f32 %v1201, %v1203
        %v1206 = vlaneseq
        %v1207 = vshrl.u32 %v1206, 7
        %v1208 = vsub.s32 0, %v1207
        %v1209 = vrot.slane %v1188, %v1208
        %v1211 = vmul.f32 %v1204, %v1209
        %v1213 = vlaneseq
        %v1214 = vshrl.u32 %v1213, 7
        %v1215 = vsub.s32 0, %v1214
        %v1216 = vrot.slane %v1189, %v1215
        %v1218 = vadd.f32 %v1211, %v1216
        %v1219 = vpack.c.bf16 %v1218, %v1218
        %v1220 = vld [vmem:[#allocation3] sm:$0xf]
        %v1221 = vld [vmem:[#allocation3 + $0x4] sm:$0xf]
        %v1222 = vld [vmem:[#allocation3 + $0x8] sm:$0xf]
        %v1223 = vld [vmem:[#allocation3 + $0xc] sm:$0xf]
        %v1224 = vld [vmem:[%s9] sm:$0x1]
        %v1226 = vlaneseq
        %v1227 = vshrl.u32 %v1226, 7
        %v1228 = vsub.s32 0, %v1227
        %v1229 = vrot.slane %v1224, %v1228
        %v1235 = vunpack.c.l.b16 %v1220
        %v1236 = vunpack.c.l.b16 %v1221
        %v1237 = vunpack.c.l.b16 %v1222
        %v1238 = vunpack.c.l.b16 %v1223
        %v1239 = vpack.c.b16 %v1236, %v1235
        %v1240 = vpack.c.b16 %v1238, %v1237
        %v1244 = vsel %vm551, %v1219, 0
        %1246 = vmatprep.subr.bf16.mxu0 0
        %1247 = vmatpush1.bf16.msra.mxu0 %v1239
        %1248 = vmatprep.subr.bf16.mxu0 0
        %1249 = vmatpush1.bf16.msra.mxu0 %v1240
        %1250 = vmatprep.subr.bf16.mxu0 0
        %1251 = vmatpush1.bf16.msra.mxu0 0
        %1252 = vmatprep.subr.bf16.mxu0 0
        %1253 = vmatpush1.bf16.msra.mxu0 0
        %1254 = vmatprep.subr.bf16.mxu0 0
        %1255 = vmatpush1.bf16.msra.mxu0 0
        %1256 = vmatprep.subr.bf16.mxu0 0
        %1257 = vmatpush1.bf16.msra.mxu0 0
        %1258 = vmatprep.subr.bf16.mxu0 0
        %1259 = vmatpush1.bf16.msra.mxu0 0
        %1260 = vmatprep.subr.bf16.mxu0 0
        %1261 = vmatpush1.bf16.msra.mxu0 0
        %1262 = vmatprep.subr.bf16.mxu0 0
        %1263 = vmatpush1.bf16.msra.mxu0 0
        %1264 = vmatprep.subr.bf16.mxu0 0
        %1265 = vmatpush1.bf16.msra.mxu0 0
        %1266 = vmatprep.subr.bf16.mxu0 0
        %1267 = vmatpush1.bf16.msra.mxu0 0
        %1268 = vmatprep.subr.bf16.mxu0 0
        %1269 = vmatpush1.bf16.msra.mxu0 0
        %1270 = vmatprep.subr.bf16.mxu0 0
        %1271 = vmatpush1.bf16.msra.mxu0 0
        %1272 = vmatprep.subr.bf16.mxu0 0
        %1273 = vmatpush1.bf16.msra.mxu0 0
        %1274 = vmatprep.subr.bf16.mxu0 0
        %1275 = vmatpush1.bf16.msra.mxu0 0
        %1276 = vmatprep.subr.bf16.mxu0 0
        %1277 = vmatpush1.bf16.msra.mxu0 0
        %1278 = vmatprep.mubr.bf16.mxu0 0
        %1279 = vmatmul.mubr.bf16.gmra.mrb[0].mxu0 %v1244
        %v1280 = vpop.f32.mrb[0].mxu0
        %v1281 = vadd.f32 %v1229, %v1280
        %v1282 = vpop.f32.mrb[0].mxu0
        %v1283 = vpop.f32.mrb[0].mxu0
        %v1284 = vpop.f32.mrb[0].mxu0
        %1285 = vdwg.mxu0
        %v1286 = vmax.f32 %v1281, 0.0
        %v1287 = vpack.c.bf16 %v1286, %v1286
        %v1288 = vld [vmem:[%s10] sm:$0xf]
        %v1289 = vld [vmem:[%s10 + $0x4] sm:$0xf]
        %v1290 = vld [vmem:[%s10 + $0x8] sm:$0xf]
        %v1291 = vld [vmem:[%s10 + $0xc] sm:$0xf]
        %v1292 = vld [vmem:[%s10 + $0x10] sm:$0xf]
        %v1293 = vld [vmem:[%s10 + $0x14] sm:$0xf]
        %v1294 = vld [vmem:[%s10 + $0x18] sm:$0xf]
        %v1295 = vld [vmem:[%s10 + $0x1c] sm:$0xf]
        %v1296 = vld [vmem:[%s11] sm:$0x1]
        %v1298 = vlaneseq
        %v1299 = vshrl.u32 %v1298, 7
        %v1300 = vsub.s32 0, %v1299
        %v1301 = vrot.slane %v1296, %v1300
        %v1311 = vunpack.c.l.b16 %v1288
        %v1312 = vunpack.c.l.b16 %v1289
        %v1313 = vunpack.c.l.b16 %v1290
        %v1314 = vunpack.c.l.b16 %v1291
        %v1315 = vunpack.c.l.b16 %v1292
        %v1316 = vunpack.c.l.b16 %v1293
        %v1317 = vunpack.c.l.b16 %v1294
        %v1318 = vunpack.c.l.b16 %v1295
        %v1319 = vpack.c.b16 %v1312, %v1311
        %v1320 = vpack.c.b16 %v1314, %v1313
        %v1321 = vpack.c.b16 %v1316, %v1315
        %v1322 = vpack.c.b16 %v1318, %v1317
        %vm1327 = vcmask 523264
        %v1329 = vsel %vm1327, %v1287, 0
        %1331 = vmatprep.subr.bf16.mxu0 0
        %1332 = vmatpush1.bf16.msra.mxu0 %v1319
        %1333 = vmatprep.subr.bf16.mxu0 0
        %1334 = vmatpush1.bf16.msra.mxu0 %v1320
        %1335 = vmatprep.subr.bf16.mxu0 0
        %1336 = vmatpush1.bf16.msra.mxu0 %v1321
        %1337 = vmatprep.subr.bf16.mxu0 0
        %1338 = vmatpush1.bf16.msra.mxu0 %v1322
        %1339 = vmatprep.subr.bf16.mxu0 0
        %1340 = vmatpush1.bf16.msra.mxu0 0
        %1341 = vmatprep.subr.bf16.mxu0 0
        %1342 = vmatpush1.bf16.msra.mxu0 0
        %1343 = vmatprep.subr.bf16.mxu0 0
        %1344 = vmatpush1.bf16.msra.mxu0 0
        %1345 = vmatprep.subr.bf16.mxu0 0
        %1346 = vmatpush1.bf16.msra.mxu0 0
        %1347 = vmatprep.subr.bf16.mxu0 0
        %1348 = vmatpush1.bf16.msra.mxu0 0
        %1349 = vmatprep.subr.bf16.mxu0 0
        %1350 = vmatpush1.bf16.msra.mxu0 0
        %1351 = vmatprep.subr.bf16.mxu0 0
        %1352 = vmatpush1.bf16.msra.mxu0 0
        %1353 = vmatprep.subr.bf16.mxu0 0
        %1354 = vmatpush1.bf16.msra.mxu0 0
        %1355 = vmatprep.subr.bf16.mxu0 0
        %1356 = vmatpush1.bf16.msra.mxu0 0
        %1357 = vmatprep.subr.bf16.mxu0 0
        %1358 = vmatpush1.bf16.msra.mxu0 0
        %1359 = vmatprep.subr.bf16.mxu0 0
        %1360 = vmatpush1.bf16.msra.mxu0 0
        %1361 = vmatprep.subr.bf16.mxu0 0
        %1362 = vmatpush1.bf16.msra.mxu0 0
        %1363 = vmatprep.mubr.bf16.mxu0 0
        %1364 = vmatmul.mubr.bf16.gmra.mrb[0].mxu0 %v1329
        %v1365 = vpop.f32.mrb[0].mxu0
        %v1366 = vadd.f32 %v1301, %v1365
        %v1367 = vpop.f32.mrb[0].mxu0
        %v1368 = vpop.f32.mrb[0].mxu0
        %v1369 = vpop.f32.mrb[0].mxu0
        %1370 = vdwg.mxu0
        %v1371 = vadd.f32 %v1187, %v1366
        %1372 = vst.msk [vmem:[%s538] sm:$0xff] %vm551, %v1371
        %s1373 = sand.u32 %s385, 1
        %s1374 = scalar_lea.sflag [#allocation5], %s1373
        %s1375 = sand.u32 %s385, 1
        %s1376 = smul.addr %s1375, 8
        %s1377 = scalar_lea.vmem [#allocation6], %s1376
        // Predicated region
        $region89: #{tpu_custom_call.1} parent=83 // pred_check
          %p1378 = pneg %p395
        $region90: #{tpu_custom_call.1} parent=83 // pred_check_branch
          %1380 = sbr.rel (%p1378) target = $region92
        $region91: #{tpu_custom_call.1} parent=83 // pred_region
          %s1382 = ssub.s32 128, 128
          %1383 = vsyncadd %s1374, %s1382
          %s1384 = smul.addr %s31, 128
          %s1385 = scalar_lea.hbm %s16, %s1384
          %s1387 = sshll.u32 %s1377, 4
          %s1388 = int_to_ptr.vmem [resolvable:$true] %s1387
          %1390 = dma.vmem_to_hbm [thread:$0]  %s1388, 128, %s1385, %s1374
        $region92: #{tpu_custom_call.1} parent=83 // pred_fallthru
          _
      $region84: #{tpu_custom_call.1} parent=5 // pred_fallthru
        _
      %p1391 = scmp.le.s32.totalorder 2, %s26
      // Predicated region
      $region93: #{tpu_custom_call.1} parent=5 // pred_check
        %p1392 = pneg %p1391
      $region94: #{tpu_custom_call.1} parent=5 // pred_check_branch
        %1394 = sbr.rel (%p1392) target = $region96
      $region95: #{tpu_custom_call.1} parent=5 // pred_region
        %s1395 = ssub.s32 %s26, 2
        // Predicated region
        $region97: #{tpu_custom_call.1} parent=95 // pred_check
          %p1396 = pneg %p401
        $region98: #{tpu_custom_call.1} parent=95 // pred_check_branch
          %1398 = sbr.rel (%p1396) target = $region100
        $region99: #{tpu_custom_call.1} parent=95 // pred_region
          %s1399 = sand.u32 %s386, 1
          %s1400 = scalar_lea.sflag [#allocation5], %s1399
          %s1401 = sand.u32 %s386, 1
          %s1402 = smul.addr %s1401, 8
          %s1403 = scalar_lea.vmem [#allocation6], %s1402
          %1404 = dma.done %s1400, 128
        $region100: #{tpu_custom_call.1} parent=95 // pred_fallthru
          _
      $region96: #{tpu_custom_call.1} parent=5 // pred_fallthru
        _
    $region6: #{tpu_custom_call.1} parent=1 // loop_footer
      %s30 = sadd.s32 1, %s26
    $region7: #{tpu_custom_call.1} parent=1 // loop_footer_branch
      %25 = sbr.rel target = $region3
    $region8: #{tpu_custom_call.1} parent=1 // loop_exit
      _
    %1405 = vsyncpa [#allocation4], 1
    %s1406 = scalar_lea.sflag [#allocation4], 1
    %1407 = vsyncpa %s1406, 1
    %1408 = vsyncpa [#allocation5], 1
    %s1409 = scalar_lea.sflag [#allocation5], 1
    %1410 = vsyncpa %s1409, 1

</llo_original>
